<compile_context>
chip_gen: v6e
topology: v6e:2x2x1
jax: 0.10.0
libtpu: 0.0.40
codegen_flags: <defaults>
</compile_context>

<pallas_src>
import functools

import jax
import jax.numpy as jnp
from jax.experimental import pallas as pl
from jax.experimental.pallas import tpu as pltpu

_KMAX = 7
_PAD = _KMAX // 2  # 3


# ------------------------------------------------------------------------------ kernel

def _msblock_kernel(x_ref, w_ref, o_ref, p_ref, *, cin, wp, ht, nbands):
    """One sample of the fused multi-scale conv block.

    x_ref : (1, Cin, Hp*Wp) bf16  zero-padded sample, spatially flattened (row stride Wp)
    w_ref : (M, K)          bf16  stacked per-scale weights, K = 49*Cin, M = 3*Cout
    o_ref : (1, M, H*Wp)    f32   ReLU(concat(conv3, conv5, conv7)) on the padded-width grid
    p_ref : (K, Ht*Wp)      bf16  VMEM scratch: im2col patch matrix of one row band
    """
    lband = ht * wp
    w = w_ref[...]                              # (M, K), VMEM-resident
    for b in range(nbands):                     # static row-band loop (1 band for small H)
        base = b * lband
        # Build the patch matrix with 49 static shifted slices of the flat padded
        # sample (row stride Wp makes every conv tap a single contiguous slice).
        for kh in range(_KMAX):
            for kw in range(_KMAX):
                t = kh * _KMAX + kw
                off = base + kh * wp + kw
                p_ref[t * cin:(t + 1) * cin, :] = x_ref[0, :, off:off + lband]
        # One MXU dot per band: (M, K) @ (K, Ht*Wp), f32 accumulation; fused ReLU.
        y = jnp.dot(w, p_ref[...], preferred_element_type=jnp.float32)
        o_ref[0, :, base:base + lband] = jnp.maximum(y, 0.0).astype(o_ref.dtype)


# ------------------------------------------------------------------------------ glue

def _weight_matrix(w_oihw):
    """(Cout,Cin,k,k) -> (Cout, 49*Cin): zero-pad spatially to 7x7 (centered), then
    flatten tap-major / channel-minor: K index = (kh*7 + kw)*Cin + ci (matches the
    patch build in the kernel)."""
    cout, cin, k, _ = w_oihw.shape
    p = (_KMAX - k) // 2
    wpad = jnp.pad(w_oihw, ((0, 0), (0, 0), (p, p), (p, p)))
    return jnp.transpose(wpad, (0, 2, 3, 1)).reshape(cout, _KMAX * _KMAX * cin)


def _pad_width(h, w, max_extra=32):
    """Padded row stride Wp >= w+6; bumped so h*Wp is a 128-multiple when cheap
    (lane-dense output slab)."""
    base = w + 2 * _PAD
    for extra in range(max_extra + 1):
        if (h * (base + extra)) % 128 == 0:
            return base + extra
    return base


def _pick_bands(h, wp, kdim, patch_budget_bytes=6 << 20):
    """Fewest row bands (divisor of h) whose bf16 patch scratch fits the budget."""
    for nb in range(1, h + 1):
        if h % nb:
            continue
        ht = h // nb
        if kdim * ht * wp * 2 <= patch_budget_bytes:
            return nb, ht
    return h, 1


# ------------------------------------------------------------------------------ wrapper

def multiscale_conv_block(x_nchw, w3, w5, w7):
    """ReLU(concat([conv3(x), conv5(x), conv7(x)], dim=1)); stride 1, 'same', no bias.

    x: (N, Cin, H, W);  wK: (Cout, Cin, K, K) in PyTorch OIHW layout.
    Returns (N, 3*Cout, H, W), matching MultiScaleConvBlock.forward.
    """
    n, cin, h, w = x_nchw.shape
    cout = w3.shape[0]
    m = 3 * cout
    kdim = _KMAX * _KMAX * cin

    wp = _pad_width(h, w)
    hp = h + 2 * _PAD + 1          # +1 bottom row keeps the last tap slice in range
    nb, ht = _pick_bands(h, wp, kdim)
    lout = h * wp

    # Zero-pad (top/left = 3, bottom/right >= 3), cast to bf16, flatten spatially.
    # TODO(synk): for images whose padded sample exceeds VMEM, add grid-level row
    # tiling with pl.Element halo offsets (and a K-reduction axis for huge Cin*Cout).
    xpad = jnp.pad(
        x_nchw, ((0, 0), (0, 0), (_PAD, hp - h - _PAD), (_PAD, wp - w - _PAD)))
    xflat = xpad.reshape(n, cin, hp * wp).astype(jnp.bfloat16)

    wmat = jnp.concatenate(
        [_weight_matrix(wk) for wk in (w3, w5, w7)], axis=0).astype(jnp.bfloat16)

    kernel = functools.partial(_msblock_kernel, cin=cin, wp=wp, ht=ht, nbands=nb)

    # Rough double-buffered working set -> explicit scoped-VMEM limit (covers v5e's
    # 16 MiB default and stays under v7x's 64 MiB physical VMEM).
    vmem_est = (2 * cin * hp * wp * 2          # input block, double-buffered, bf16
                + 2 * m * kdim * 2             # weights (constant index), bf16
                + 2 * m * lout * 4             # output block, double-buffered, f32
                + kdim * ht * wp * 2)          # patch scratch, bf16
    vmem_limit = int(min(64 << 20, max(32 << 20, 2 * vmem_est)))

    out = pl.pallas_call(
        kernel,
        out_shape=jax.ShapeDtypeStruct((n, m, lout), jnp.float32),
        grid_spec=pltpu.PrefetchScalarGridSpec(
            num_scalar_prefetch=0,
            grid=(n,),
            in_specs=[
                pl.BlockSpec((1, cin, hp * wp), lambda ni: (ni, 0, 0)),
                pl.BlockSpec((m, kdim), lambda ni: (0, 0)),   # VMEM-resident weights
            ],
            out_specs=pl.BlockSpec((1, m, lout), lambda ni: (ni, 0, 0)),
            scratch_shapes=[pltpu.VMEM((kdim, ht * wp), jnp.bfloat16)],
        ),
        compiler_params=pltpu.CompilerParams(
            dimension_semantics=("parallel",),
            vmem_limit_bytes=vmem_limit),
    )(xflat, wmat)

    # Drop the padded-width garbage columns.
    return out.reshape(n, m, h, wp)[..., :w]


# ------------------------------------------------------------------------------ reference

def _reference(x, w3, w5, w7):
    outs = []
    for wk in (w3, w5, w7):
        k = wk.shape[-1]
        outs.append(jax.lax.conv_general_dilated(
            x, wk, window_strides=(1, 1), padding=[(k // 2, k // 2)] * 2,
            dimension_numbers=("NCHW", "OIHW", "NCHW")))
    return jnp.maximum(jnp.concatenate(outs, axis=1), 0.0)


# ------------------------------------------------------------------------------ main

if __name__ == "__main__":
    # Module-consistent small shapes: batch=2, in_channels=4, 16x16, out_channels=8.
    N, C, H, W = 2, 4, 16, 16
    COUT = 8

    key = jax.random.PRNGKey(0)
    kx, k3, k5, k7 = jax.random.split(key, 4)
    x = jax.random.normal(kx, (N, C, H, W), jnp.float32)          # PyTorch-style NCHW
    w3 = 0.1 * jax.random.normal(k3, (COUT, C, 3, 3), jnp.float32)
    w5 = 0.1 * jax.random.normal(k5, (COUT, C, 5, 5), jnp.float32)
    w7 = 0.1 * jax.random.normal(k7, (COUT, C, 7, 7), jnp.float32)

    out = jax.jit(multiscale_conv_block)(x, w3, w5, w7)
    jax.block_until_ready(out)

    assert out.shape == (N, 3 * COUT, H, W) and out.dtype == jnp.float32
    assert bool(jnp.all(jnp.isfinite(out)))

    # Validate against the pure-JAX f32 reference (tolerance covers the bf16 operands).
    ref = _reference(x, w3, w5, w7)
    err = float(jnp.max(jnp.abs(out - ref)))
    assert err < 6e-2, f"max abs error {err} vs reference"

    print("KERNEL_OK")
</pallas_src>

<mosaic_0001>
module attributes {stable_mosaic.version = 11 : i64} {
  func.func @_msblock_kernel(%arg0: i32, %arg1: memref<1x4x552xbf16, #tpu.memory_space<vmem>>, %arg2: memref<24x196xbf16, #tpu.memory_space<vmem>>, %arg3: memref<1x24x384xf32, #tpu.memory_space<vmem>>, %arg4: memref<196x384xbf16, #tpu.memory_space<vmem>>) attributes {dimension_semantics = [#tpu.dimension_semantics<parallel>], iteration_bounds = array<i64: 2>, scalar_prefetch = 0 : i64, scratch_operands = 1 : i64, tpu.core_type = #tpu.core_type<tc>, window_params = [{transform_indices = @transform_0, window_bounds = array<i64: 1, 4, 552>}, {pipeline_mode = #tpu.pipeline_mode<synchronous>, transform_indices = @transform_1, window_bounds = array<i64: 24, 196>}, {transform_indices = @transform_2, window_bounds = array<i64: 1, 24, 384>}]} {
    %c0 = arith.constant 0 : index
    %c0_0 = arith.constant 0 : index
    %0 = vector.load %arg2[%c0, %c0_0] : memref<24x196xbf16, #tpu.memory_space<vmem>>, vector<24x196xbf16>
    %c0_1 = arith.constant 0 : index
    %c0_2 = arith.constant 0 : index
    %c0_3 = arith.constant 0 : index
    %1 = vector.load %arg1[%c0_1, %c0_2, %c0_3] : memref<1x4x552xbf16, #tpu.memory_space<vmem>>, vector<1x4x384xbf16>
    %2 = vector.shape_cast %1 : vector<1x4x384xbf16> to vector<4x384xbf16>
    %c0_4 = arith.constant 0 : index
    %c0_5 = arith.constant 0 : index
    %3 = vector.load %arg4[%c0_4, %c0_5] : memref<196x384xbf16, #tpu.memory_space<vmem>>, vector<4x384xbf16>
    tpu.vector_store %arg4[%c0_4, %c0_5], %2 {strides = array<i32>} : memref<196x384xbf16, #tpu.memory_space<vmem>>, vector<4x384xbf16>,
    %c0_6 = arith.constant 0 : index
    %c0_7 = arith.constant 0 : index
    %c1 = arith.constant 1 : index
    %4 = vector.load %arg1[%c0_6, %c0_7, %c1] : memref<1x4x552xbf16, #tpu.memory_space<vmem>>, vector<1x4x384xbf16>
    %5 = vector.shape_cast %4 : vector<1x4x384xbf16> to vector<4x384xbf16>
    %c4 = arith.constant 4 : index
    %c0_8 = arith.constant 0 : index
    %6 = vector.load %arg4[%c4, %c0_8] : memref<196x384xbf16, #tpu.memory_space<vmem>>, vector<4x384xbf16>
    tpu.vector_store %arg4[%c4, %c0_8], %5 {strides = array<i32>} : memref<196x384xbf16, #tpu.memory_space<vmem>>, vector<4x384xbf16>,
    %c0_9 = arith.constant 0 : index
    %c0_10 = arith.constant 0 : index
    %c2 = arith.constant 2 : index
    %7 = vector.load %arg1[%c0_9, %c0_10, %c2] : memref<1x4x552xbf16, #tpu.memory_space<vmem>>, vector<1x4x384xbf16>
    %8 = vector.shape_cast %7 : vector<1x4x384xbf16> to vector<4x384xbf16>
    %c8 = arith.constant 8 : index
    %c0_11 = arith.constant 0 : index
    %9 = vector.load %arg4[%c8, %c0_11] : memref<196x384xbf16, #tpu.memory_space<vmem>>, vector<4x384xbf16>
    tpu.vector_store %arg4[%c8, %c0_11], %8 {strides = array<i32>} : memref<196x384xbf16, #tpu.memory_space<vmem>>, vector<4x384xbf16>,
    %c0_12 = arith.constant 0 : index
    %c0_13 = arith.constant 0 : index
    %c3 = arith.constant 3 : index
    %10 = vector.load %arg1[%c0_12, %c0_13, %c3] : memref<1x4x552xbf16, #tpu.memory_space<vmem>>, vector<1x4x384xbf16>
    %11 = vector.shape_cast %10 : vector<1x4x384xbf16> to vector<4x384xbf16>
    %c12 = arith.constant 12 : index
    %c0_14 = arith.constant 0 : index
    %12 = vector.load %arg4[%c12, %c0_14] : memref<196x384xbf16, #tpu.memory_space<vmem>>, vector<4x384xbf16>
    tpu.vector_store %arg4[%c12, %c0_14], %11 {strides = array<i32>} : memref<196x384xbf16, #tpu.memory_space<vmem>>, vector<4x384xbf16>,
    %c0_15 = arith.constant 0 : index
    %c0_16 = arith.constant 0 : index
    %c4_17 = arith.constant 4 : index
    %13 = vector.load %arg1[%c0_15, %c0_16, %c4_17] : memref<1x4x552xbf16, #tpu.memory_space<vmem>>, vector<1x4x384xbf16>
    %14 = vector.shape_cast %13 : vector<1x4x384xbf16> to vector<4x384xbf16>
    %c16 = arith.constant 16 : index
    %c0_18 = arith.constant 0 : index
    %15 = vector.load %arg4[%c16, %c0_18] : memref<196x384xbf16, #tpu.memory_space<vmem>>, vector<4x384xbf16>
    tpu.vector_store %arg4[%c16, %c0_18], %14 {strides = array<i32>} : memref<196x384xbf16, #tpu.memory_space<vmem>>, vector<4x384xbf16>,
    %c0_19 = arith.constant 0 : index
    %c0_20 = arith.constant 0 : index
    %c5 = arith.constant 5 : index
    %16 = vector.load %arg1[%c0_19, %c0_20, %c5] : memref<1x4x552xbf16, #tpu.memory_space<vmem>>, vector<1x4x384xbf16>
    %17 = vector.shape_cast %16 : vector<1x4x384xbf16> to vector<4x384xbf16>
    %c20 = arith.constant 20 : index
    %c0_21 = arith.constant 0 : index
    %18 = vector.load %arg4[%c20, %c0_21] : memref<196x384xbf16, #tpu.memory_space<vmem>>, vector<4x384xbf16>
    tpu.vector_store %arg4[%c20, %c0_21], %17 {strides = array<i32>} : memref<196x384xbf16, #tpu.memory_space<vmem>>, vector<4x384xbf16>,
    %c0_22 = arith.constant 0 : index
    %c0_23 = arith.constant 0 : index
    %c6 = arith.constant 6 : index
    %19 = vector.load %arg1[%c0_22, %c0_23, %c6] : memref<1x4x552xbf16, #tpu.memory_space<vmem>>, vector<1x4x384xbf16>
    %20 = vector.shape_cast %19 : vector<1x4x384xbf16> to vector<4x384xbf16>
    %c24 = arith.constant 24 : index
    %c0_24 = arith.constant 0 : index
    %21 = vector.load %arg4[%c24, %c0_24] : memref<196x384xbf16, #tpu.memory_space<vmem>>, vector<4x384xbf16>
    tpu.vector_store %arg4[%c24, %c0_24], %20 {strides = array<i32>} : memref<196x384xbf16, #tpu.memory_space<vmem>>, vector<4x384xbf16>,
    %c0_25 = arith.constant 0 : index
    %c0_26 = arith.constant 0 : index
    %c24_27 = arith.constant 24 : index
    %22 = vector.load %arg1[%c0_25, %c0_26, %c24_27] : memref<1x4x552xbf16, #tpu.memory_space<vmem>>, vector<1x4x384xbf16>
    %23 = vector.shape_cast %22 : vector<1x4x384xbf16> to vector<4x384xbf16>
    %c28 = arith.constant 28 : index
    %c0_28 = arith.constant 0 : index
    %24 = vector.load %arg4[%c28, %c0_28] : memref<196x384xbf16, #tpu.memory_space<vmem>>, vector<4x384xbf16>
    tpu.vector_store %arg4[%c28, %c0_28], %23 {strides = array<i32>} : memref<196x384xbf16, #tpu.memory_space<vmem>>, vector<4x384xbf16>,
    %c0_29 = arith.constant 0 : index
    %c0_30 = arith.constant 0 : index
    %c25 = arith.constant 25 : index
    %25 = vector.load %arg1[%c0_29, %c0_30, %c25] : memref<1x4x552xbf16, #tpu.memory_space<vmem>>, vector<1x4x384xbf16>
    %26 = vector.shape_cast %25 : vector<1x4x384xbf16> to vector<4x384xbf16>
    %c32 = arith.constant 32 : index
    %c0_31 = arith.constant 0 : index
    %27 = vector.load %arg4[%c32, %c0_31] : memref<196x384xbf16, #tpu.memory_space<vmem>>, vector<4x384xbf16>
    tpu.vector_store %arg4[%c32, %c0_31], %26 {strides = array<i32>} : memref<196x384xbf16, #tpu.memory_space<vmem>>, vector<4x384xbf16>,
    %c0_32 = arith.constant 0 : index
    %c0_33 = arith.constant 0 : index
    %c26 = arith.constant 26 : index
    %28 = vector.load %arg1[%c0_32, %c0_33, %c26] : memref<1x4x552xbf16, #tpu.memory_space<vmem>>, vector<1x4x384xbf16>
    %29 = vector.shape_cast %28 : vector<1x4x384xbf16> to vector<4x384xbf16>
    %c36 = arith.constant 36 : index
    %c0_34 = arith.constant 0 : index
    %30 = vector.load %arg4[%c36, %c0_34] : memref<196x384xbf16, #tpu.memory_space<vmem>>, vector<4x384xbf16>
    tpu.vector_store %arg4[%c36, %c0_34], %29 {strides = array<i32>} : memref<196x384xbf16, #tpu.memory_space<vmem>>, vector<4x384xbf16>,
    %c0_35 = arith.constant 0 : index
    %c0_36 = arith.constant 0 : index
    %c27 = arith.constant 27 : index
    %31 = vector.load %arg1[%c0_35, %c0_36, %c27] : memref<1x4x552xbf16, #tpu.memory_space<vmem>>, vector<1x4x384xbf16>
    %32 = vector.shape_cast %31 : vector<1x4x384xbf16> to vector<4x384xbf16>
    %c40 = arith.constant 40 : index
    %c0_37 = arith.constant 0 : index
    %33 = vector.load %arg4[%c40, %c0_37] : memref<196x384xbf16, #tpu.memory_space<vmem>>, vector<4x384xbf16>
    tpu.vector_store %arg4[%c40, %c0_37], %32 {strides = array<i32>} : memref<196x384xbf16, #tpu.memory_space<vmem>>, vector<4x384xbf16>,
    %c0_38 = arith.constant 0 : index
    %c0_39 = arith.constant 0 : index
    %c28_40 = arith.constant 28 : index
    %34 = vector.load %arg1[%c0_38, %c0_39, %c28_40] : memref<1x4x552xbf16, #tpu.memory_space<vmem>>, vector<1x4x384xbf16>
    %35 = vector.shape_cast %34 : vector<1x4x384xbf16> to vector<4x384xbf16>
    %c44 = arith.constant 44 : index
    %c0_41 = arith.constant 0 : index
    %36 = vector.load %arg4[%c44, %c0_41] : memref<196x384xbf16, #tpu.memory_space<vmem>>, vector<4x384xbf16>
    tpu.vector_store %arg4[%c44, %c0_41], %35 {strides = array<i32>} : memref<196x384xbf16, #tpu.memory_space<vmem>>, vector<4x384xbf16>,
    %c0_42 = arith.constant 0 : index
    %c0_43 = arith.constant 0 : index
    %c29 = arith.constant 29 : index
    %37 = vector.load %arg1[%c0_42, %c0_43, %c29] : memref<1x4x552xbf16, #tpu.memory_space<vmem>>, vector<1x4x384xbf16>
    %38 = vector.shape_cast %37 : vector<1x4x384xbf16> to vector<4x384xbf16>
    %c48 = arith.constant 48 : index
    %c0_44 = arith.constant 0 : index
    %39 = vector.load %arg4[%c48, %c0_44] : memref<196x384xbf16, #tpu.memory_space<vmem>>, vector<4x384xbf16>
    tpu.vector_store %arg4[%c48, %c0_44], %38 {strides = array<i32>} : memref<196x384xbf16, #tpu.memory_space<vmem>>, vector<4x384xbf16>,
    %c0_45 = arith.constant 0 : index
    %c0_46 = arith.constant 0 : index
    %c30 = arith.constant 30 : index
    %40 = vector.load %arg1[%c0_45, %c0_46, %c30] : memref<1x4x552xbf16, #tpu.memory_space<vmem>>, vector<1x4x384xbf16>
    %41 = vector.shape_cast %40 : vector<1x4x384xbf16> to vector<4x384xbf16>
    %c52 = arith.constant 52 : index
    %c0_47 = arith.constant 0 : index
    %42 = vector.load %arg4[%c52, %c0_47] : memref<196x384xbf16, #tpu.memory_space<vmem>>, vector<4x384xbf16>
    tpu.vector_store %arg4[%c52, %c0_47], %41 {strides = array<i32>} : memref<196x384xbf16, #tpu.memory_space<vmem>>, vector<4x384xbf16>,
    %c0_48 = arith.constant 0 : index
    %c0_49 = arith.constant 0 : index
    %c48_50 = arith.constant 48 : index
    %43 = vector.load %arg1[%c0_48, %c0_49, %c48_50] : memref<1x4x552xbf16, #tpu.memory_space<vmem>>, vector<1x4x384xbf16>
    %44 = vector.shape_cast %43 : vector<1x4x384xbf16> to vector<4x384xbf16>
    %c56 = arith.constant 56 : index
    %c0_51 = arith.constant 0 : index
    %45 = vector.load %arg4[%c56, %c0_51] : memref<196x384xbf16, #tpu.memory_space<vmem>>, vector<4x384xbf16>
    tpu.vector_store %arg4[%c56, %c0_51], %44 {strides = array<i32>} : memref<196x384xbf16, #tpu.memory_space<vmem>>, vector<4x384xbf16>,
    %c0_52 = arith.constant 0 : index
    %c0_53 = arith.constant 0 : index
    %c49 = arith.constant 49 : index
    %46 = vector.load %arg1[%c0_52, %c0_53, %c49] : memref<1x4x552xbf16, #tpu.memory_space<vmem>>, vector<1x4x384xbf16>
    %47 = vector.shape_cast %46 : vector<1x4x384xbf16> to vector<4x384xbf16>
    %c60 = arith.constant 60 : index
    %c0_54 = arith.constant 0 : index
    %48 = vector.load %arg4[%c60, %c0_54] : memref<196x384xbf16, #tpu.memory_space<vmem>>, vector<4x384xbf16>
    tpu.vector_store %arg4[%c60, %c0_54], %47 {strides = array<i32>} : memref<196x384xbf16, #tpu.memory_space<vmem>>, vector<4x384xbf16>,
    %c0_55 = arith.constant 0 : index
    %c0_56 = arith.constant 0 : index
    %c50 = arith.constant 50 : index
    %49 = vector.load %arg1[%c0_55, %c0_56, %c50] : memref<1x4x552xbf16, #tpu.memory_space<vmem>>, vector<1x4x384xbf16>
    %50 = vector.shape_cast %49 : vector<1x4x384xbf16> to vector<4x384xbf16>
    %c64 = arith.constant 64 : index
    %c0_57 = arith.constant 0 : index
    %51 = vector.load %arg4[%c64, %c0_57] : memref<196x384xbf16, #tpu.memory_space<vmem>>, vector<4x384xbf16>
    tpu.vector_store %arg4[%c64, %c0_57], %50 {strides = array<i32>} : memref<196x384xbf16, #tpu.memory_space<vmem>>, vector<4x384xbf16>,
    %c0_58 = arith.constant 0 : index
    %c0_59 = arith.constant 0 : index
    %c51 = arith.constant 51 : index
    %52 = vector.load %arg1[%c0_58, %c0_59, %c51] : memref<1x4x552xbf16, #tpu.memory_space<vmem>>, vector<1x4x384xbf16>
    %53 = vector.shape_cast %52 : vector<1x4x384xbf16> to vector<4x384xbf16>
    %c68 = arith.constant 68 : index
    %c0_60 = arith.constant 0 : index
    %54 = vector.load %arg4[%c68, %c0_60] : memref<196x384xbf16, #tpu.memory_space<vmem>>, vector<4x384xbf16>
    tpu.vector_store %arg4[%c68, %c0_60], %53 {strides = array<i32>} : memref<196x384xbf16, #tpu.memory_space<vmem>>, vector<4x384xbf16>,
    %c0_61 = arith.constant 0 : index
    %c0_62 = arith.constant 0 : index
    %c52_63 = arith.constant 52 : index
    %55 = vector.load %arg1[%c0_61, %c0_62, %c52_63] : memref<1x4x552xbf16, #tpu.memory_space<vmem>>, vector<1x4x384xbf16>
    %56 = vector.shape_cast %55 : vector<1x4x384xbf16> to vector<4x384xbf16>
    %c72 = arith.constant 72 : index
    %c0_64 = arith.constant 0 : index
    %57 = vector.load %arg4[%c72, %c0_64] : memref<196x384xbf16, #tpu.memory_space<vmem>>, vector<4x384xbf16>
    tpu.vector_store %arg4[%c72, %c0_64], %56 {strides = array<i32>} : memref<196x384xbf16, #tpu.memory_space<vmem>>, vector<4x384xbf16>,
    %c0_65 = arith.constant 0 : index
    %c0_66 = arith.constant 0 : index
    %c53 = arith.constant 53 : index
    %58 = vector.load %arg1[%c0_65, %c0_66, %c53] : memref<1x4x552xbf16, #tpu.memory_space<vmem>>, vector<1x4x384xbf16>
    %59 = vector.shape_cast %58 : vector<1x4x384xbf16> to vector<4x384xbf16>
    %c76 = arith.constant 76 : index
    %c0_67 = arith.constant 0 : index
    %60 = vector.load %arg4[%c76, %c0_67] : memref<196x384xbf16, #tpu.memory_space<vmem>>, vector<4x384xbf16>
    tpu.vector_store %arg4[%c76, %c0_67], %59 {strides = array<i32>} : memref<196x384xbf16, #tpu.memory_space<vmem>>, vector<4x384xbf16>,
    %c0_68 = arith.constant 0 : index
    %c0_69 = arith.constant 0 : index
    %c54 = arith.constant 54 : index
    %61 = vector.load %arg1[%c0_68, %c0_69, %c54] : memref<1x4x552xbf16, #tpu.memory_space<vmem>>, vector<1x4x384xbf16>
    %62 = vector.shape_cast %61 : vector<1x4x384xbf16> to vector<4x384xbf16>
    %c80 = arith.constant 80 : index
    %c0_70 = arith.constant 0 : index
    %63 = vector.load %arg4[%c80, %c0_70] : memref<196x384xbf16, #tpu.memory_space<vmem>>, vector<4x384xbf16>
    tpu.vector_store %arg4[%c80, %c0_70], %62 {strides = array<i32>} : memref<196x384xbf16, #tpu.memory_space<vmem>>, vector<4x384xbf16>,
    %c0_71 = arith.constant 0 : index
    %c0_72 = arith.constant 0 : index
    %c72_73 = arith.constant 72 : index
    %64 = vector.load %arg1[%c0_71, %c0_72, %c72_73] : memref<1x4x552xbf16, #tpu.memory_space<vmem>>, vector<1x4x384xbf16>
    %65 = vector.shape_cast %64 : vector<1x4x384xbf16> to vector<4x384xbf16>
    %c84 = arith.constant 84 : index
    %c0_74 = arith.constant 0 : index
    %66 = vector.load %arg4[%c84, %c0_74] : memref<196x384xbf16, #tpu.memory_space<vmem>>, vector<4x384xbf16>
    tpu.vector_store %arg4[%c84, %c0_74], %65 {strides = array<i32>} : memref<196x384xbf16, #tpu.memory_space<vmem>>, vector<4x384xbf16>,
    %c0_75 = arith.constant 0 : index
    %c0_76 = arith.constant 0 : index
    %c73 = arith.constant 73 : index
    %67 = vector.load %arg1[%c0_75, %c0_76, %c73] : memref<1x4x552xbf16, #tpu.memory_space<vmem>>, vector<1x4x384xbf16>
    %68 = vector.shape_cast %67 : vector<1x4x384xbf16> to vector<4x384xbf16>
    %c88 = arith.constant 88 : index
    %c0_77 = arith.constant 0 : index
    %69 = vector.load %arg4[%c88, %c0_77] : memref<196x384xbf16, #tpu.memory_space<vmem>>, vector<4x384xbf16>
    tpu.vector_store %arg4[%c88, %c0_77], %68 {strides = array<i32>} : memref<196x384xbf16, #tpu.memory_space<vmem>>, vector<4x384xbf16>,
    %c0_78 = arith.constant 0 : index
    %c0_79 = arith.constant 0 : index
    %c74 = arith.constant 74 : index
    %70 = vector.load %arg1[%c0_78, %c0_79, %c74] : memref<1x4x552xbf16, #tpu.memory_space<vmem>>, vector<1x4x384xbf16>
    %71 = vector.shape_cast %70 : vector<1x4x384xbf16> to vector<4x384xbf16>
    %c92 = arith.constant 92 : index
    %c0_80 = arith.constant 0 : index
    %72 = vector.load %arg4[%c92, %c0_80] : memref<196x384xbf16, #tpu.memory_space<vmem>>, vector<4x384xbf16>
    tpu.vector_store %arg4[%c92, %c0_80], %71 {strides = array<i32>} : memref<196x384xbf16, #tpu.memory_space<vmem>>, vector<4x384xbf16>,
    %c0_81 = arith.constant 0 : index
    %c0_82 = arith.constant 0 : index
    %c75 = arith.constant 75 : index
    %73 = vector.load %arg1[%c0_81, %c0_82, %c75] : memref<1x4x552xbf16, #tpu.memory_space<vmem>>, vector<1x4x384xbf16>
    %74 = vector.shape_cast %73 : vector<1x4x384xbf16> to vector<4x384xbf16>
    %c96 = arith.constant 96 : index
    %c0_83 = arith.constant 0 : index
    %75 = vector.load %arg4[%c96, %c0_83] : memref<196x384xbf16, #tpu.memory_space<vmem>>, vector<4x384xbf16>
    tpu.vector_store %arg4[%c96, %c0_83], %74 {strides = array<i32>} : memref<196x384xbf16, #tpu.memory_space<vmem>>, vector<4x384xbf16>,
    %c0_84 = arith.constant 0 : index
    %c0_85 = arith.constant 0 : index
    %c76_86 = arith.constant 76 : index
    %76 = vector.load %arg1[%c0_84, %c0_85, %c76_86] : memref<1x4x552xbf16, #tpu.memory_space<vmem>>, vector<1x4x384xbf16>
    %77 = vector.shape_cast %76 : vector<1x4x384xbf16> to vector<4x384xbf16>
    %c100 = arith.constant 100 : index
    %c0_87 = arith.constant 0 : index
    %78 = vector.load %arg4[%c100, %c0_87] : memref<196x384xbf16, #tpu.memory_space<vmem>>, vector<4x384xbf16>
    tpu.vector_store %arg4[%c100, %c0_87], %77 {strides = array<i32>} : memref<196x384xbf16, #tpu.memory_space<vmem>>, vector<4x384xbf16>,
    %c0_88 = arith.constant 0 : index
    %c0_89 = arith.constant 0 : index
    %c77 = arith.constant 77 : index
    %79 = vector.load %arg1[%c0_88, %c0_89, %c77] : memref<1x4x552xbf16, #tpu.memory_space<vmem>>, vector<1x4x384xbf16>
    %80 = vector.shape_cast %79 : vector<1x4x384xbf16> to vector<4x384xbf16>
    %c104 = arith.constant 104 : index
    %c0_90 = arith.constant 0 : index
    %81 = vector.load %arg4[%c104, %c0_90] : memref<196x384xbf16, #tpu.memory_space<vmem>>, vector<4x384xbf16>
    tpu.vector_store %arg4[%c104, %c0_90], %80 {strides = array<i32>} : memref<196x384xbf16, #tpu.memory_space<vmem>>, vector<4x384xbf16>,
    %c0_91 = arith.constant 0 : index
    %c0_92 = arith.constant 0 : index
    %c78 = arith.constant 78 : index
    %82 = vector.load %arg1[%c0_91, %c0_92, %c78] : memref<1x4x552xbf16, #tpu.memory_space<vmem>>, vector<1x4x384xbf16>
    %83 = vector.shape_cast %82 : vector<1x4x384xbf16> to vector<4x384xbf16>
    %c108 = arith.constant 108 : index
    %c0_93 = arith.constant 0 : index
    %84 = vector.load %arg4[%c108, %c0_93] : memref<196x384xbf16, #tpu.memory_space<vmem>>, vector<4x384xbf16>
    tpu.vector_store %arg4[%c108, %c0_93], %83 {strides = array<i32>} : memref<196x384xbf16, #tpu.memory_space<vmem>>, vector<4x384xbf16>,
    %c0_94 = arith.constant 0 : index
    %c0_95 = arith.constant 0 : index
    %c96_96 = arith.constant 96 : index
    %85 = vector.load %arg1[%c0_94, %c0_95, %c96_96] : memref<1x4x552xbf16, #tpu.memory_space<vmem>>, vector<1x4x384xbf16>
    %86 = vector.shape_cast %85 : vector<1x4x384xbf16> to vector<4x384xbf16>
    %c112 = arith.constant 112 : index
    %c0_97 = arith.constant 0 : index
    %87 = vector.load %arg4[%c112, %c0_97] : memref<196x384xbf16, #tpu.memory_space<vmem>>, vector<4x384xbf16>
    tpu.vector_store %arg4[%c112, %c0_97], %86 {strides = array<i32>} : memref<196x384xbf16, #tpu.memory_space<vmem>>, vector<4x384xbf16>,
    %c0_98 = arith.constant 0 : index
    %c0_99 = arith.constant 0 : index
    %c97 = arith.constant 97 : index
    %88 = vector.load %arg1[%c0_98, %c0_99, %c97] : memref<1x4x552xbf16, #tpu.memory_space<vmem>>, vector<1x4x384xbf16>
    %89 = vector.shape_cast %88 : vector<1x4x384xbf16> to vector<4x384xbf16>
    %c116 = arith.constant 116 : index
    %c0_100 = arith.constant 0 : index
    %90 = vector.load %arg4[%c116, %c0_100] : memref<196x384xbf16, #tpu.memory_space<vmem>>, vector<4x384xbf16>
    tpu.vector_store %arg4[%c116, %c0_100], %89 {strides = array<i32>} : memref<196x384xbf16, #tpu.memory_space<vmem>>, vector<4x384xbf16>,
    %c0_101 = arith.constant 0 : index
    %c0_102 = arith.constant 0 : index
    %c98 = arith.constant 98 : index
    %91 = vector.load %arg1[%c0_101, %c0_102, %c98] : memref<1x4x552xbf16, #tpu.memory_space<vmem>>, vector<1x4x384xbf16>
    %92 = vector.shape_cast %91 : vector<1x4x384xbf16> to vector<4x384xbf16>
    %c120 = arith.constant 120 : index
    %c0_103 = arith.constant 0 : index
    %93 = vector.load %arg4[%c120, %c0_103] : memref<196x384xbf16, #tpu.memory_space<vmem>>, vector<4x384xbf16>
    tpu.vector_store %arg4[%c120, %c0_103], %92 {strides = array<i32>} : memref<196x384xbf16, #tpu.memory_space<vmem>>, vector<4x384xbf16>,
    %c0_104 = arith.constant 0 : index
    %c0_105 = arith.constant 0 : index
    %c99 = arith.constant 99 : index
    %94 = vector.load %arg1[%c0_104, %c0_105, %c99] : memref<1x4x552xbf16, #tpu.memory_space<vmem>>, vector<1x4x384xbf16>
    %95 = vector.shape_cast %94 : vector<1x4x384xbf16> to vector<4x384xbf16>
    %c124 = arith.constant 124 : index
    %c0_106 = arith.constant 0 : index
    %96 = vector.load %arg4[%c124, %c0_106] : memref<196x384xbf16, #tpu.memory_space<vmem>>, vector<4x384xbf16>
    tpu.vector_store %arg4[%c124, %c0_106], %95 {strides = array<i32>} : memref<196x384xbf16, #tpu.memory_space<vmem>>, vector<4x384xbf16>,
    %c0_107 = arith.constant 0 : index
    %c0_108 = arith.constant 0 : index
    %c100_109 = arith.constant 100 : index
    %97 = vector.load %arg1[%c0_107, %c0_108, %c100_109] : memref<1x4x552xbf16, #tpu.memory_space<vmem>>, vector<1x4x384xbf16>
    %98 = vector.shape_cast %97 : vector<1x4x384xbf16> to vector<4x384xbf16>
    %c128 = arith.constant 128 : index
    %c0_110 = arith.constant 0 : index
    %99 = vector.load %arg4[%c128, %c0_110] : memref<196x384xbf16, #tpu.memory_space<vmem>>, vector<4x384xbf16>
    tpu.vector_store %arg4[%c128, %c0_110], %98 {strides = array<i32>} : memref<196x384xbf16, #tpu.memory_space<vmem>>, vector<4x384xbf16>,
    %c0_111 = arith.constant 0 : index
    %c0_112 = arith.constant 0 : index
    %c101 = arith.constant 101 : index
    %100 = vector.load %arg1[%c0_111, %c0_112, %c101] : memref<1x4x552xbf16, #tpu.memory_space<vmem>>, vector<1x4x384xbf16>
    %101 = vector.shape_cast %100 : vector<1x4x384xbf16> to vector<4x384xbf16>
    %c132 = arith.constant 132 : index
    %c0_113 = arith.constant 0 : index
    %102 = vector.load %arg4[%c132, %c0_113] : memref<196x384xbf16, #tpu.memory_space<vmem>>, vector<4x384xbf16>
    tpu.vector_store %arg4[%c132, %c0_113], %101 {strides = array<i32>} : memref<196x384xbf16, #tpu.memory_space<vmem>>, vector<4x384xbf16>,
    %c0_114 = arith.constant 0 : index
    %c0_115 = arith.constant 0 : index
    %c102 = arith.constant 102 : index
    %103 = vector.load %arg1[%c0_114, %c0_115, %c102] : memref<1x4x552xbf16, #tpu.memory_space<vmem>>, vector<1x4x384xbf16>
    %104 = vector.shape_cast %103 : vector<1x4x384xbf16> to vector<4x384xbf16>
    %c136 = arith.constant 136 : index
    %c0_116 = arith.constant 0 : index
    %105 = vector.load %arg4[%c136, %c0_116] : memref<196x384xbf16, #tpu.memory_space<vmem>>, vector<4x384xbf16>
    tpu.vector_store %arg4[%c136, %c0_116], %104 {strides = array<i32>} : memref<196x384xbf16, #tpu.memory_space<vmem>>, vector<4x384xbf16>,
    %c0_117 = arith.constant 0 : index
    %c0_118 = arith.constant 0 : index
    %c120_119 = arith.constant 120 : index
    %106 = vector.load %arg1[%c0_117, %c0_118, %c120_119] : memref<1x4x552xbf16, #tpu.memory_space<vmem>>, vector<1x4x384xbf16>
    %107 = vector.shape_cast %106 : vector<1x4x384xbf16> to vector<4x384xbf16>
    %c140 = arith.constant 140 : index
    %c0_120 = arith.constant 0 : index
    %108 = vector.load %arg4[%c140, %c0_120] : memref<196x384xbf16, #tpu.memory_space<vmem>>, vector<4x384xbf16>
    tpu.vector_store %arg4[%c140, %c0_120], %107 {strides = array<i32>} : memref<196x384xbf16, #tpu.memory_space<vmem>>, vector<4x384xbf16>,
    %c0_121 = arith.constant 0 : index
    %c0_122 = arith.constant 0 : index
    %c121 = arith.constant 121 : index
    %109 = vector.load %arg1[%c0_121, %c0_122, %c121] : memref<1x4x552xbf16, #tpu.memory_space<vmem>>, vector<1x4x384xbf16>
    %110 = vector.shape_cast %109 : vector<1x4x384xbf16> to vector<4x384xbf16>
    %c144 = arith.constant 144 : index
    %c0_123 = arith.constant 0 : index
    %111 = vector.load %arg4[%c144, %c0_123] : memref<196x384xbf16, #tpu.memory_space<vmem>>, vector<4x384xbf16>
    tpu.vector_store %arg4[%c144, %c0_123], %110 {strides = array<i32>} : memref<196x384xbf16, #tpu.memory_space<vmem>>, vector<4x384xbf16>,
    %c0_124 = arith.constant 0 : index
    %c0_125 = arith.constant 0 : index
    %c122 = arith.constant 122 : index
    %112 = vector.load %arg1[%c0_124, %c0_125, %c122] : memref<1x4x552xbf16, #tpu.memory_space<vmem>>, vector<1x4x384xbf16>
    %113 = vector.shape_cast %112 : vector<1x4x384xbf16> to vector<4x384xbf16>
    %c148 = arith.constant 148 : index
    %c0_126 = arith.constant 0 : index
    %114 = vector.load %arg4[%c148, %c0_126] : memref<196x384xbf16, #tpu.memory_space<vmem>>, vector<4x384xbf16>
    tpu.vector_store %arg4[%c148, %c0_126], %113 {strides = array<i32>} : memref<196x384xbf16, #tpu.memory_space<vmem>>, vector<4x384xbf16>,
    %c0_127 = arith.constant 0 : index
    %c0_128 = arith.constant 0 : index
    %c123 = arith.constant 123 : index
    %115 = vector.load %arg1[%c0_127, %c0_128, %c123] : memref<1x4x552xbf16, #tpu.memory_space<vmem>>, vector<1x4x384xbf16>
    %116 = vector.shape_cast %115 : vector<1x4x384xbf16> to vector<4x384xbf16>
    %c152 = arith.constant 152 : index
    %c0_129 = arith.constant 0 : index
    %117 = vector.load %arg4[%c152, %c0_129] : memref<196x384xbf16, #tpu.memory_space<vmem>>, vector<4x384xbf16>
    tpu.vector_store %arg4[%c152, %c0_129], %116 {strides = array<i32>} : memref<196x384xbf16, #tpu.memory_space<vmem>>, vector<4x384xbf16>,
    %c0_130 = arith.constant 0 : index
    %c0_131 = arith.constant 0 : index
    %c124_132 = arith.constant 124 : index
    %118 = vector.load %arg1[%c0_130, %c0_131, %c124_132] : memref<1x4x552xbf16, #tpu.memory_space<vmem>>, vector<1x4x384xbf16>
    %119 = vector.shape_cast %118 : vector<1x4x384xbf16> to vector<4x384xbf16>
    %c156 = arith.constant 156 : index
    %c0_133 = arith.constant 0 : index
    %120 = vector.load %arg4[%c156, %c0_133] : memref<196x384xbf16, #tpu.memory_space<vmem>>, vector<4x384xbf16>
    tpu.vector_store %arg4[%c156, %c0_133], %119 {strides = array<i32>} : memref<196x384xbf16, #tpu.memory_space<vmem>>, vector<4x384xbf16>,
    %c0_134 = arith.constant 0 : index
    %c0_135 = arith.constant 0 : index
    %c125 = arith.constant 125 : index
    %121 = vector.load %arg1[%c0_134, %c0_135, %c125] : memref<1x4x552xbf16, #tpu.memory_space<vmem>>, vector<1x4x384xbf16>
    %122 = vector.shape_cast %121 : vector<1x4x384xbf16> to vector<4x384xbf16>
    %c160 = arith.constant 160 : index
    %c0_136 = arith.constant 0 : index
    %123 = vector.load %arg4[%c160, %c0_136] : memref<196x384xbf16, #tpu.memory_space<vmem>>, vector<4x384xbf16>
    tpu.vector_store %arg4[%c160, %c0_136], %122 {strides = array<i32>} : memref<196x384xbf16, #tpu.memory_space<vmem>>, vector<4x384xbf16>,
    %c0_137 = arith.constant 0 : index
    %c0_138 = arith.constant 0 : index
    %c126 = arith.constant 126 : index
    %124 = vector.load %arg1[%c0_137, %c0_138, %c126] : memref<1x4x552xbf16, #tpu.memory_space<vmem>>, vector<1x4x384xbf16>
    %125 = vector.shape_cast %124 : vector<1x4x384xbf16> to vector<4x384xbf16>
    %c164 = arith.constant 164 : index
    %c0_139 = arith.constant 0 : index
    %126 = vector.load %arg4[%c164, %c0_139] : memref<196x384xbf16, #tpu.memory_space<vmem>>, vector<4x384xbf16>
    tpu.vector_store %arg4[%c164, %c0_139], %125 {strides = array<i32>} : memref<196x384xbf16, #tpu.memory_space<vmem>>, vector<4x384xbf16>,
    %c0_140 = arith.constant 0 : index
    %c0_141 = arith.constant 0 : index
    %c144_142 = arith.constant 144 : index
    %127 = vector.load %arg1[%c0_140, %c0_141, %c144_142] : memref<1x4x552xbf16, #tpu.memory_space<vmem>>, vector<1x4x384xbf16>
    %128 = vector.shape_cast %127 : vector<1x4x384xbf16> to vector<4x384xbf16>
    %c168 = arith.constant 168 : index
    %c0_143 = arith.constant 0 : index
    %129 = vector.load %arg4[%c168, %c0_143] : memref<196x384xbf16, #tpu.memory_space<vmem>>, vector<4x384xbf16>
    tpu.vector_store %arg4[%c168, %c0_143], %128 {strides = array<i32>} : memref<196x384xbf16, #tpu.memory_space<vmem>>, vector<4x384xbf16>,
    %c0_144 = arith.constant 0 : index
    %c0_145 = arith.constant 0 : index
    %c145 = arith.constant 145 : index
    %130 = vector.load %arg1[%c0_144, %c0_145, %c145] : memref<1x4x552xbf16, #tpu.memory_space<vmem>>, vector<1x4x384xbf16>
    %131 = vector.shape_cast %130 : vector<1x4x384xbf16> to vector<4x384xbf16>
    %c172 = arith.constant 172 : index
    %c0_146 = arith.constant 0 : index
    %132 = vector.load %arg4[%c172, %c0_146] : memref<196x384xbf16, #tpu.memory_space<vmem>>, vector<4x384xbf16>
    tpu.vector_store %arg4[%c172, %c0_146], %131 {strides = array<i32>} : memref<196x384xbf16, #tpu.memory_space<vmem>>, vector<4x384xbf16>,
    %c0_147 = arith.constant 0 : index
    %c0_148 = arith.constant 0 : index
    %c146 = arith.constant 146 : index
    %133 = vector.load %arg1[%c0_147, %c0_148, %c146] : memref<1x4x552xbf16, #tpu.memory_space<vmem>>, vector<1x4x384xbf16>
    %134 = vector.shape_cast %133 : vector<1x4x384xbf16> to vector<4x384xbf16>
    %c176 = arith.constant 176 : index
    %c0_149 = arith.constant 0 : index
    %135 = vector.load %arg4[%c176, %c0_149] : memref<196x384xbf16, #tpu.memory_space<vmem>>, vector<4x384xbf16>
    tpu.vector_store %arg4[%c176, %c0_149], %134 {strides = array<i32>} : memref<196x384xbf16, #tpu.memory_space<vmem>>, vector<4x384xbf16>,
    %c0_150 = arith.constant 0 : index
    %c0_151 = arith.constant 0 : index
    %c147 = arith.constant 147 : index
    %136 = vector.load %arg1[%c0_150, %c0_151, %c147] : memref<1x4x552xbf16, #tpu.memory_space<vmem>>, vector<1x4x384xbf16>
    %137 = vector.shape_cast %136 : vector<1x4x384xbf16> to vector<4x384xbf16>
    %c180 = arith.constant 180 : index
    %c0_152 = arith.constant 0 : index
    %138 = vector.load %arg4[%c180, %c0_152] : memref<196x384xbf16, #tpu.memory_space<vmem>>, vector<4x384xbf16>
    tpu.vector_store %arg4[%c180, %c0_152], %137 {strides = array<i32>} : memref<196x384xbf16, #tpu.memory_space<vmem>>, vector<4x384xbf16>,
    %c0_153 = arith.constant 0 : index
    %c0_154 = arith.constant 0 : index
    %c148_155 = arith.constant 148 : index
    %139 = vector.load %arg1[%c0_153, %c0_154, %c148_155] : memref<1x4x552xbf16, #tpu.memory_space<vmem>>, vector<1x4x384xbf16>
    %140 = vector.shape_cast %139 : vector<1x4x384xbf16> to vector<4x384xbf16>
    %c184 = arith.constant 184 : index
    %c0_156 = arith.constant 0 : index
    %141 = vector.load %arg4[%c184, %c0_156] : memref<196x384xbf16, #tpu.memory_space<vmem>>, vector<4x384xbf16>
    tpu.vector_store %arg4[%c184, %c0_156], %140 {strides = array<i32>} : memref<196x384xbf16, #tpu.memory_space<vmem>>, vector<4x384xbf16>,
    %c0_157 = arith.constant 0 : index
    %c0_158 = arith.constant 0 : index
    %c149 = arith.constant 149 : index
    %142 = vector.load %arg1[%c0_157, %c0_158, %c149] : memref<1x4x552xbf16, #tpu.memory_space<vmem>>, vector<1x4x384xbf16>
    %143 = vector.shape_cast %142 : vector<1x4x384xbf16> to vector<4x384xbf16>
    %c188 = arith.constant 188 : index
    %c0_159 = arith.constant 0 : index
    %144 = vector.load %arg4[%c188, %c0_159] : memref<196x384xbf16, #tpu.memory_space<vmem>>, vector<4x384xbf16>
    tpu.vector_store %arg4[%c188, %c0_159], %143 {strides = array<i32>} : memref<196x384xbf16, #tpu.memory_space<vmem>>, vector<4x384xbf16>,
    %c0_160 = arith.constant 0 : index
    %c0_161 = arith.constant 0 : index
    %c150 = arith.constant 150 : index
    %145 = vector.load %arg1[%c0_160, %c0_161, %c150] : memref<1x4x552xbf16, #tpu.memory_space<vmem>>, vector<1x4x384xbf16>
    %146 = vector.shape_cast %145 : vector<1x4x384xbf16> to vector<4x384xbf16>
    %c192 = arith.constant 192 : index
    %c0_162 = arith.constant 0 : index
    %147 = vector.load %arg4[%c192, %c0_162] : memref<196x384xbf16, #tpu.memory_space<vmem>>, vector<4x384xbf16>
    tpu.vector_store %arg4[%c192, %c0_162], %146 {strides = array<i32>} : memref<196x384xbf16, #tpu.memory_space<vmem>>, vector<4x384xbf16>,
    %c0_163 = arith.constant 0 : index
    %c0_164 = arith.constant 0 : index
    %148 = vector.load %arg4[%c0_163, %c0_164] : memref<196x384xbf16, #tpu.memory_space<vmem>>, vector<196x384xbf16>
    %cst = arith.constant dense<0.000000e+00> : vector<24x384xf32>
    %149 = tpu.matmul %0, %148, %cst {dimension_numbers = #tpu.dot_dimension_numbers<[1], [0], [0], [1], [0, 0, 1, 1], [], []>} : vector<24x196xbf16>, vector<196x384xbf16>, vector<24x384xf32> -> vector<24x384xf32>
    %cst_165 = arith.constant 0.000000e+00 : f32
    %150 = vector.broadcast %cst_165 : f32 to vector<24x384xf32>
    %151 = arith.maximumf %149, %150 : vector<24x384xf32>
    %c0_166 = arith.constant 0 : index
    %c0_167 = arith.constant 0 : index
    %c0_168 = arith.constant 0 : index
    %152 = vector.load %arg3[%c0_166, %c0_167, %c0_168] : memref<1x24x384xf32, #tpu.memory_space<vmem>>, vector<1x24x384xf32>
    %153 = vector.shape_cast %152 : vector<1x24x384xf32> to vector<24x384xf32>
    %154 = vector.shape_cast %151 : vector<24x384xf32> to vector<1x24x384xf32>
    tpu.vector_store %arg3[%c0_166, %c0_167, %c0_168], %154 {strides = array<i32>} : memref<1x24x384xf32, #tpu.memory_space<vmem>>, vector<1x24x384xf32>,
    return
  }
  func.func @transform_0(%arg0: i32) -> (i32, i32, i32) {
    %c0_i32 = arith.constant 0 : i32
    %c0_i32_0 = arith.constant 0 : i32
    %c0_i32_1 = arith.constant 0 : i32
    return %arg0, %c0_i32, %c0_i32_0 : i32, i32, i32
  }
  func.func @transform_1(%arg0: i32) -> (i32, i32) {
    %c0_i32 = arith.constant 0 : i32
    %c0_i32_0 = arith.constant 0 : i32
    %c0_i32_1 = arith.constant 0 : i32
    return %c0_i32, %c0_i32_0 : i32, i32
  }
  func.func @transform_2(%arg0: i32) -> (i32, i32, i32) {
    %c0_i32 = arith.constant 0 : i32
    %c0_i32_0 = arith.constant 0 : i32
    %c0_i32_1 = arith.constant 0 : i32
    return %arg0, %c0_i32, %c0_i32_0 : i32, i32, i32
  }
}

</mosaic_0001>

<llo_original>
// kernel: multiscale_conv_block.1
$region0: #{multiscale_conv_block.1}
  #allocation0 [shape = 'u32[]', space=smem, size = 0x4, offset = 0x4, fixed_abs, tag = 'smem constant byte address 0x4 - core index']
  #allocation1 [shape = 'u32[144,128]{1,0:T(1,128)}', space=vmem, size = 0x12000, scoped, tag = 'internal scratch']
  #allocation2 [shape = 'bf16[196,384]{1,0:T(8,128)(2,1)}', space=vmem, size = 0x25800, scoped, tag = 'scratch operand']
  %s0 = inlined_call_operand.vmem [shape: bf16[2,4,552], index: 0, kind: input, shape index: {}]
  %s1 = inlined_call_operand.vmem [shape: bf16[24,196], index: 1, kind: input, shape index: {}]
  %s2 = inlined_call_operand.vmem [shape: f32[2,24,384], index: 2, kind: output, shape index: {}]
  %s3 = sld [smem:[#allocation0]]
  $region41: #{multiscale_conv_block.1} parent=0
    _
  %s5 = ssub.s32 1, %s3
  %s6 = scalar_select 0, %s5, %s3
  loop: start=0, step=1, limit=4
  $region2: #{multiscale_conv_block.1} parent=0 // loop_pre_header
    _
  $region3: #{multiscale_conv_block.1} parent=0 // loop_header
    %s8 = sphi 0, %s12
    %p9 = scmp.ge.s32.totalorder %s8, 4
    %s18 = sphi 0, %s20
    %s21 = sphi 0, %s18
    %s22 = sphi 0, %s21
    %s38 = sphi 0, %s22
    %s42 = sphi 0, %s42
    %s44 = sphi 0, %s42
    %s45 = sphi 0, %s44
    %s59 = sphi 0, %s45
    %s65 = sphi 0, %s67
    %s68 = sphi 0, %s65
    %s69 = sphi 0, %s68
    %s85 = sphi 0, %s69
  $region4: #{multiscale_conv_block.1} parent=0 // loop_header_branch
    %11 = sbr.rel (%p9) target = $region8
  $region5: #{multiscale_conv_block.1} parent=0 // loop_body
    %s13 = ssub.s32 %s8, 1
    %s14 = ssub.s32 %s8, 2
    %s15 = sadd.s32 %s8, 1
    %s16 = ssub.s32 %s8, %s15
    %p17 = scmp.eq.s32.totalorder %s16, 0
    %s19 = sadd.s32 %s18, 1
    %s20 = scalar_select %p17, %s18, %s19
    %p23 = pneg %p17
    %p24 = scmp.eq.s32.totalorder %s8, 1
    %p25 = por %p23, %p24
    %p26 = scmp.ne.s32.totalorder %s18, %s21
    %p27 = scmp.eq.s32.totalorder %s8, 0
    %p28 = por %p26, %p27
    %p29 = scmp.ne.s32.totalorder %s18, %s21
    %p30 = scmp.eq.s32.totalorder %s13, 1
    %p31 = por %p29, %p30
    %p32 = scmp.ne.s32.totalorder %s21, %s22
    %p33 = scmp.eq.s32.totalorder %s13, 0
    %p34 = por %p32, %p33
    %p35 = scmp.ne.s32.totalorder %s21, %s22
    %p36 = scmp.eq.s32.totalorder %s14, 1
    %p37 = por %p35, %p36
    %p39 = scmp.ne.s32.totalorder %s22, %s38
    %p40 = scmp.eq.s32.totalorder %s14, 0
    %p41 = por %p39, %p40
    %s43 = sadd.s32 %s42, 1
    %p46 = scmp.eq.s32.totalorder %s8, 1
    %p47 = scmp.ne.s32.totalorder %s42, %s44
    %p48 = scmp.eq.s32.totalorder %s8, 0
    %p49 = por %p47, %p48
    %p50 = scmp.ne.s32.totalorder %s42, %s44
    %p51 = scmp.eq.s32.totalorder %s13, 1
    %p52 = por %p50, %p51
    %p53 = scmp.ne.s32.totalorder %s44, %s45
    %p54 = scmp.eq.s32.totalorder %s13, 0
    %p55 = por %p53, %p54
    %p56 = scmp.ne.s32.totalorder %s44, %s45
    %p57 = scmp.eq.s32.totalorder %s14, 1
    %p58 = por %p56, %p57
    %p60 = scmp.ne.s32.totalorder %s45, %s59
    %p61 = scmp.eq.s32.totalorder %s14, 0
    %p62 = por %p60, %p61
    %s63 = ssub.s32 %s8, %s15
    %p64 = scmp.eq.s32.totalorder %s63, 0
    %s66 = sadd.s32 %s65, 1
    %s67 = scalar_select %p64, %s65, %s66
    %p70 = pneg %p64
    %p71 = scmp.eq.s32.totalorder %s8, 1
    %p72 = por %p70, %p71
    %p73 = scmp.ne.s32.totalorder %s65, %s68
    %p74 = scmp.eq.s32.totalorder %s8, 0
    %p75 = por %p73, %p74
    %p76 = scmp.ne.s32.totalorder %s65, %s68
    %p77 = scmp.eq.s32.totalorder %s13, 1
    %p78 = por %p76, %p77
    %p79 = scmp.ne.s32.totalorder %s68, %s69
    %p80 = scmp.eq.s32.totalorder %s13, 0
    %p81 = por %p79, %p80
    %p82 = scmp.ne.s32.totalorder %s68, %s69
    %p83 = scmp.eq.s32.totalorder %s14, 1
    %p84 = por %p82, %p83
    %p86 = scmp.ne.s32.totalorder %s69, %s85
    %p87 = scmp.eq.s32.totalorder %s14, 0
    %p88 = por %p86, %p87
    %p89 = scmp.le.s32.totalorder 1, %s8
    %p90 = scmp.lt.s32.totalorder %s8, 3
    %p91 = pnand %p89, %p90
    %p92 = pneg %p91
    // Predicated region
    $region9: #{multiscale_conv_block.1} parent=5 // pred_check
      _
    $region10: #{multiscale_conv_block.1} parent=5 // pred_check_branch
      %94 = sbr.rel (%p91) target = $region12
    $region11: #{multiscale_conv_block.1} parent=5 // pred_region
      %s95 = ssub.s32 %s8, 1
      // Predicated region
      $region13: #{multiscale_conv_block.1} parent=11 // pred_check
        %p96 = pneg %p55
      $region14: #{multiscale_conv_block.1} parent=11 // pred_check_branch
        %98 = sbr.rel (%p96) target = $region16
      $region15: #{multiscale_conv_block.1} parent=11 // pred_region
        _
      $region16: #{multiscale_conv_block.1} parent=11 // pred_fallthru
        _
    $region12: #{multiscale_conv_block.1} parent=5 // pred_fallthru
      _
    %p99 = scmp.lt.s32.totalorder %s8, 2
    // Predicated region
    $region17: #{multiscale_conv_block.1} parent=5 // pred_check
      %p100 = pneg %p99
    $region18: #{multiscale_conv_block.1} parent=5 // pred_check_branch
      %102 = sbr.rel (%p100) target = $region20
    $region19: #{multiscale_conv_block.1} parent=5 // pred_region
      // Predicated region
      $region21: #{multiscale_conv_block.1} parent=19 // pred_check
        %p103 = pneg %p28
      $region22: #{multiscale_conv_block.1} parent=19 // pred_check_branch
        %105 = sbr.rel (%p103) target = $region24
      $region23: #{multiscale_conv_block.1} parent=19 // pred_region
        %p106 = scmp.lt.s32.totalorder %s8, 1
        %s107 = scalar_select %p106, %s8, 1
        %s108 = smul.addr %s107, 5
        %s109 = smul.addr %s108, 2
        %s110 = scalar_lea.vmem %s0, %s109
      $region24: #{multiscale_conv_block.1} parent=19 // pred_fallthru
        _
    $region20: #{multiscale_conv_block.1} parent=5 // pred_fallthru
      _
    %p111 = scmp.le.s32.totalorder 1, %s8
    %p112 = scmp.lt.s32.totalorder %s8, 3
    %p113 = pnand %p111, %p112
    %p114 = pneg %p113
    // Predicated region
    $region25: #{multiscale_conv_block.1} parent=5 // pred_check
      _
    $region26: #{multiscale_conv_block.1} parent=5 // pred_check_branch
      %116 = sbr.rel (%p113) target = $region28
    $region27: #{multiscale_conv_block.1} parent=5 // pred_region
      %s117 = ssub.s32 %s8, 1
      %p118 = scmp.lt.s32.totalorder %s13, 1
      %s119 = scalar_select %p118, %s13, 1
      %s120 = smul.addr %s119, 5
      %s121 = smul.addr %s120, 2
      %s122 = scalar_lea.vmem %s0, %s121
      %p123 = pneg %p34
      %p124 = pneg %p31
      %p125 = pneg %p55
      %p126 = pneg %p52
      %p127 = pneg %p81
      %p128 = pneg %p78
      %p129 = scmp.lt.s32.totalorder %s13, 1
      %s130 = scalar_select %p129, %s13, 1
      %s131 = smul.addr %s130, 9
      %s132 = smul.addr %s131, 8
      %s133 = scalar_lea.vmem %s2, %s132
      %p134 = scmp.lt.s32.totalorder %s13, 1
      %s135 = scalar_select %p134, %s13, 1
      %s136 = smul.addr %s135, 5
      %s137 = smul.addr %s136, 2
      %s138 = scalar_lea.vmem %s0, %s137
      %p139 = scmp.lt.s32.totalorder %s13, 1
      %s140 = scalar_select %p139, %s13, 1
      %s141 = smul.addr %s140, 9
      %s142 = smul.addr %s141, 8
      %s143 = scalar_lea.vmem %s2, %s142
      %v145 = vld [vmem:[%s1] sm:$0xff]
      %v146 = vld [vmem:[%s1 + $0x8] sm:$0xff]
      %v147 = vld [vmem:[%s1 + $0x10] sm:$0xff]
      %v148 = vld [vmem:[%s138] sm:$0x3f]
      %v150 = vcombine.high %v148, %v148
      %v152 = vunpack.c.l.s4 1983009808
      %v153 = vunpack.c.0.s8 %v152
      %v154 = vlaneseq
      %v155 = vshrl.u32 %v154, 7
      %v156 = vsub.s32 %v153, %v155
      %v157 = vrot.slane %v148, %v156
      %v159 = vunpack.c.l.s4 1983009808
      %v160 = vunpack.c.0.s8 %v159
      %v161 = vlaneseq
      %v162 = vshrl.u32 %v161, 7
      %v163 = vsub.s32 %v160, %v162
      %v164 = vrot.slane %v150, %v163
      %167 = vst [vmem:[#allocation2] sm:$0x33] %v157
      %168 = vst [vmem:[#allocation2 + $0x8] sm:$0x3] %v164
      %v169 = vld [vmem:[%s138] sm:$0xff]
      %v171 = vcombine.low %v169, %v169
      %v173 = vunpack.c.l.s4 1983009808
      %v174 = vunpack.c.0.s8 %v173
      %v175 = vlaneseq
      %v176 = vshrl.u32 %v175, 7
      %v177 = vsub.s32 %v174, %v176
      %v178 = vrot.slane %v171, %v177
      %v180 = vunpack.c.l.s4 1983009808
      %v181 = vunpack.c.0.s8 %v180
      %v182 = vlaneseq
      %v183 = vshrl.u32 %v182, 7
      %v184 = vsub.s32 %v181, %v183
      %v185 = vrot.slane %v169, %v184
      %186 = vrot.lane.b32.xlu0 %v178, 127
      %v187 = vpop.permute.xlu0 %186
      %188 = vrot.lane.b32.xlu0 %v185, 127
      %v189 = vpop.permute.xlu0 %188
      %v190 = vrot.slane %v187, 4
      %v191 = vrot.slane %v189, 4
      %vm192 = vcmask 1043456
      %v193 = vsel %vm192, %v190, %v191
      %vm194 = vcmask 1039360
      %v195 = vsel %vm194, %v187, %v193
      %v196 = vsel %vm194, %v189, %v191
      %199 = vst [vmem:[#allocation2] sm:$0xcc] %v195
      %200 = vst [vmem:[#allocation2 + $0x8] sm:$0xc] %v196
      %v201 = vld [vmem:[%s138] sm:$0xff]
      %v203 = vcombine.high %v201, %v201
      %v205 = vunpack.c.l.s4 1983009808
      %v206 = vunpack.c.0.s8 %v205
      %v207 = vlaneseq
      %v208 = vshrl.u32 %v207, 7
      %v209 = vsub.s32 %v206, %v208
      %v210 = vrot.slane %v201, %v209
      %v212 = vunpack.c.l.s4 1983009808
      %v213 = vunpack.c.0.s8 %v212
      %v214 = vlaneseq
      %v215 = vshrl.u32 %v214, 7
      %v216 = vsub.s32 %v213, %v215
      %v217 = vrot.slane %v203, %v216
      %218 = vrot.lane.b32.xlu0 %v210, 126
      %v219 = vpop.permute.xlu0 %218
      %220 = vrot.lane.b32.xlu0 %v217, 126
      %v221 = vpop.permute.xlu0 %220
      %v222 = vrot.slane %v219, 4
      %v223 = vrot.slane %v221, 4
      %v224 = vsel %vm192, %v222, %v223
      %vm225 = vcmask 1031168
      %v226 = vsel %vm225, %v219, %v224
      %v227 = vsel %vm225, %v221, %v223
      %230 = vst [vmem:[#allocation2 + $0xc] sm:$0x33] %v226
      %231 = vst [vmem:[#allocation2 + $0x14] sm:$0x3] %v227
      %v232 = vld [vmem:[%s138] sm:$0xff]
      %v234 = vcombine.low %v232, %v232
      %v236 = vunpack.c.l.s4 1983009808
      %v237 = vunpack.c.0.s8 %v236
      %v238 = vlaneseq
      %v239 = vshrl.u32 %v238, 7
      %v240 = vsub.s32 %v237, %v239
      %v241 = vrot.slane %v234, %v240
      %v243 = vunpack.c.l.s4 1983009808
      %v244 = vunpack.c.0.s8 %v243
      %v245 = vlaneseq
      %v246 = vshrl.u32 %v245, 7
      %v247 = vsub.s32 %v244, %v246
      %v248 = vrot.slane %v232, %v247
      %249 = vrot.lane.b32.xlu0 %v241, 125
      %v250 = vpop.permute.xlu0 %249
      %251 = vrot.lane.b32.xlu0 %v248, 125
      %v252 = vpop.permute.xlu0 %251
      %v253 = vrot.slane %v250, 4
      %v254 = vrot.slane %v252, 4
      %v255 = vsel %vm192, %v253, %v254
      %vm256 = vcmask 1022976
      %v257 = vsel %vm256, %v250, %v255
      %v258 = vsel %vm256, %v252, %v254
      %261 = vst [vmem:[#allocation2 + $0xc] sm:$0xcc] %v257
      %262 = vst [vmem:[#allocation2 + $0x14] sm:$0xc] %v258
      %v263 = vld [vmem:[%s138] sm:$0xff]
      %v265 = vcombine.high %v263, %v263
      %v267 = vunpack.c.l.s4 1983009808
      %v268 = vunpack.c.0.s8 %v267
      %v269 = vlaneseq
      %v270 = vshrl.u32 %v269, 7
      %v271 = vsub.s32 %v268, %v270
      %v272 = vrot.slane %v263, %v271
      %v274 = vunpack.c.l.s4 1983009808
      %v275 = vunpack.c.0.s8 %v274
      %v276 = vlaneseq
      %v277 = vshrl.u32 %v276, 7
      %v278 = vsub.s32 %v275, %v277
      %v279 = vrot.slane %v265, %v278
      %280 = vrot.lane.b32.xlu0 %v272, 124
      %v281 = vpop.permute.xlu0 %280
      %282 = vrot.lane.b32.xlu0 %v279, 124
      %v283 = vpop.permute.xlu0 %282
      %v284 = vrot.slane %v281, 4
      %v285 = vrot.slane %v283, 4
      %v286 = vsel %vm192, %v284, %v285
      %vm287 = vcmask 1014784
      %v288 = vsel %vm287, %v281, %v286
      %v289 = vsel %vm287, %v283, %v285
      %292 = vst [vmem:[#allocation2 + $0x18] sm:$0x33] %v288
      %293 = vst [vmem:[#allocation2 + $0x20] sm:$0x3] %v289
      %v294 = vld [vmem:[%s138] sm:$0xff]
      %v296 = vcombine.low %v294, %v294
      %v298 = vunpack.c.l.s4 1983009808
      %v299 = vunpack.c.0.s8 %v298
      %v300 = vlaneseq
      %v301 = vshrl.u32 %v300, 7
      %v302 = vsub.s32 %v299, %v301
      %v303 = vrot.slane %v296, %v302
      %v305 = vunpack.c.l.s4 1983009808
      %v306 = vunpack.c.0.s8 %v305
      %v307 = vlaneseq
      %v308 = vshrl.u32 %v307, 7
      %v309 = vsub.s32 %v306, %v308
      %v310 = vrot.slane %v294, %v309
      %311 = vrot.lane.b32.xlu0 %v303, 123
      %v312 = vpop.permute.xlu0 %311
      %313 = vrot.lane.b32.xlu0 %v310, 123
      %v314 = vpop.permute.xlu0 %313
      %v315 = vrot.slane %v312, 4
      %v316 = vrot.slane %v314, 4
      %v317 = vsel %vm192, %v315, %v316
      %vm318 = vcmask 1006592
      %v319 = vsel %vm318, %v312, %v317
      %v320 = vsel %vm318, %v314, %v316
      %323 = vst [vmem:[#allocation2 + $0x18] sm:$0xcc] %v319
      %324 = vst [vmem:[#allocation2 + $0x20] sm:$0xc] %v320
      %v325 = vld [vmem:[%s138] sm:$0xff]
      %v327 = vcombine.high %v325, %v325
      %v329 = vunpack.c.l.s4 1983009808
      %v330 = vunpack.c.0.s8 %v329
      %v331 = vlaneseq
      %v332 = vshrl.u32 %v331, 7
      %v333 = vsub.s32 %v330, %v332
      %v334 = vrot.slane %v325, %v333
      %v336 = vunpack.c.l.s4 1983009808
      %v337 = vunpack.c.0.s8 %v336
      %v338 = vlaneseq
      %v339 = vshrl.u32 %v338, 7
      %v340 = vsub.s32 %v337, %v339
      %v341 = vrot.slane %v327, %v340
      %342 = vrot.lane.b32.xlu0 %v334, 122
      %v343 = vpop.permute.xlu0 %342
      %344 = vrot.lane.b32.xlu0 %v341, 122
      %v345 = vpop.permute.xlu0 %344
      %v346 = vrot.slane %v343, 4
      %v347 = vrot.slane %v345, 4
      %v348 = vsel %vm192, %v346, %v347
      %vm349 = vcmask 998400
      %v350 = vsel %vm349, %v343, %v348
      %v351 = vsel %vm349, %v345, %v347
      %354 = vst [vmem:[#allocation2 + $0x24] sm:$0x33] %v350
      %355 = vst [vmem:[#allocation2 + $0x2c] sm:$0x3] %v351
      %v356 = vld [vmem:[%s138] sm:$0xff]
      %v358 = vcombine.low %v356, %v356
      %v360 = vunpack.c.l.s4 1983009808
      %v361 = vunpack.c.0.s8 %v360
      %v362 = vlaneseq
      %v363 = vshrl.u32 %v362, 7
      %v364 = vsub.s32 %v361, %v363
      %v365 = vrot.slane %v358, %v364
      %v367 = vunpack.c.l.s4 1983009808
      %v368 = vunpack.c.0.s8 %v367
      %v369 = vlaneseq
      %v370 = vshrl.u32 %v369, 7
      %v371 = vsub.s32 %v368, %v370
      %v372 = vrot.slane %v356, %v371
      %373 = vrot.lane.b32.xlu0 %v365, 104
      %v374 = vpop.permute.xlu0 %373
      %375 = vrot.lane.b32.xlu0 %v372, 104
      %v376 = vpop.permute.xlu0 %375
      %v377 = vrot.slane %v374, 4
      %v378 = vrot.slane %v376, 4
      %v379 = vsel %vm192, %v377, %v378
      %vm380 = vcmask 850944
      %v381 = vsel %vm380, %v374, %v379
      %v382 = vsel %vm380, %v376, %v378
      %385 = vst [vmem:[#allocation2 + $0x24] sm:$0xcc] %v381
      %386 = vst [vmem:[#allocation2 + $0x2c] sm:$0xc] %v382
      %v387 = vld [vmem:[%s138] sm:$0xff]
      %v389 = vcombine.high %v387, %v387
      %v391 = vunpack.c.l.s4 1983009808
      %v392 = vunpack.c.0.s8 %v391
      %v393 = vlaneseq
      %v394 = vshrl.u32 %v393, 7
      %v395 = vsub.s32 %v392, %v394
      %v396 = vrot.slane %v387, %v395
      %v398 = vunpack.c.l.s4 1983009808
      %v399 = vunpack.c.0.s8 %v398
      %v400 = vlaneseq
      %v401 = vshrl.u32 %v400, 7
      %v402 = vsub.s32 %v399, %v401
      %v403 = vrot.slane %v389, %v402
      %404 = vrot.lane.b32.xlu0 %v396, 103
      %v405 = vpop.permute.xlu0 %404
      %406 = vrot.lane.b32.xlu0 %v403, 103
      %v407 = vpop.permute.xlu0 %406
      %v408 = vrot.slane %v405, 4
      %v409 = vrot.slane %v407, 4
      %v410 = vsel %vm192, %v408, %v409
      %vm411 = vcmask 842752
      %v412 = vsel %vm411, %v405, %v410
      %v413 = vsel %vm411, %v407, %v409
      %416 = vst [vmem:[#allocation2 + $0x30] sm:$0x33] %v412
      %417 = vst [vmem:[#allocation2 + $0x38] sm:$0x3] %v413
      %v418 = vld [vmem:[%s138] sm:$0xff]
      %v420 = vcombine.low %v418, %v418
      %v422 = vunpack.c.l.s4 1983009808
      %v423 = vunpack.c.0.s8 %v422
      %v424 = vlaneseq
      %v425 = vshrl.u32 %v424, 7
      %v426 = vsub.s32 %v423, %v425
      %v427 = vrot.slane %v420, %v426
      %v429 = vunpack.c.l.s4 1983009808
      %v430 = vunpack.c.0.s8 %v429
      %v431 = vlaneseq
      %v432 = vshrl.u32 %v431, 7
      %v433 = vsub.s32 %v430, %v432
      %v434 = vrot.slane %v418, %v433
      %435 = vrot.lane.b32.xlu0 %v427, 102
      %v436 = vpop.permute.xlu0 %435
      %437 = vrot.lane.b32.xlu0 %v434, 102
      %v438 = vpop.permute.xlu0 %437
      %v439 = vrot.slane %v436, 4
      %v440 = vrot.slane %v438, 4
      %v441 = vsel %vm192, %v439, %v440
      %vm442 = vcmask 834560
      %v443 = vsel %vm442, %v436, %v441
      %v444 = vsel %vm442, %v438, %v440
      %447 = vst [vmem:[#allocation2 + $0x30] sm:$0xcc] %v443
      %448 = vst [vmem:[#allocation2 + $0x38] sm:$0xc] %v444
      %v449 = vld [vmem:[%s138] sm:$0xff]
      %v451 = vcombine.high %v449, %v449
      %v453 = vunpack.c.l.s4 1983009808
      %v454 = vunpack.c.0.s8 %v453
      %v455 = vlaneseq
      %v456 = vshrl.u32 %v455, 7
      %v457 = vsub.s32 %v454, %v456
      %v458 = vrot.slane %v449, %v457
      %v460 = vunpack.c.l.s4 1983009808
      %v461 = vunpack.c.0.s8 %v460
      %v462 = vlaneseq
      %v463 = vshrl.u32 %v462, 7
      %v464 = vsub.s32 %v461, %v463
      %v465 = vrot.slane %v451, %v464
      %466 = vrot.lane.b32.xlu0 %v458, 101
      %v467 = vpop.permute.xlu0 %466
      %468 = vrot.lane.b32.xlu0 %v465, 101
      %v469 = vpop.permute.xlu0 %468
      %v470 = vrot.slane %v467, 4
      %v471 = vrot.slane %v469, 4
      %v472 = vsel %vm192, %v470, %v471
      %vm473 = vcmask 826368
      %v474 = vsel %vm473, %v467, %v472
      %v475 = vsel %vm473, %v469, %v471
      %478 = vst [vmem:[#allocation2 + $0x3c] sm:$0x33] %v474
      %479 = vst [vmem:[#allocation2 + $0x44] sm:$0x3] %v475
      %v480 = vld [vmem:[%s138] sm:$0xff]
      %v482 = vcombine.low %v480, %v480
      %v484 = vunpack.c.l.s4 1983009808
      %v485 = vunpack.c.0.s8 %v484
      %v486 = vlaneseq
      %v487 = vshrl.u32 %v486, 7
      %v488 = vsub.s32 %v485, %v487
      %v489 = vrot.slane %v482, %v488
      %v491 = vunpack.c.l.s4 1983009808
      %v492 = vunpack.c.0.s8 %v491
      %v493 = vlaneseq
      %v494 = vshrl.u32 %v493, 7
      %v495 = vsub.s32 %v492, %v494
      %v496 = vrot.slane %v480, %v495
      %497 = vrot.lane.b32.xlu0 %v489, 100
      %v498 = vpop.permute.xlu0 %497
      %499 = vrot.lane.b32.xlu0 %v496, 100
      %v500 = vpop.permute.xlu0 %499
      %v501 = vrot.slane %v498, 4
      %v502 = vrot.slane %v500, 4
      %v503 = vsel %vm192, %v501, %v502
      %vm504 = vcmask 818176
      %v505 = vsel %vm504, %v498, %v503
      %v506 = vsel %vm504, %v500, %v502
      %509 = vst [vmem:[#allocation2 + $0x3c] sm:$0xcc] %v505
      %510 = vst [vmem:[#allocation2 + $0x44] sm:$0xc] %v506
      %v511 = vld [vmem:[%s138] sm:$0xff]
      %v513 = vcombine.high %v511, %v511
      %v515 = vunpack.c.l.s4 1983009808
      %v516 = vunpack.c.0.s8 %v515
      %v517 = vlaneseq
      %v518 = vshrl.u32 %v517, 7
      %v519 = vsub.s32 %v516, %v518
      %v520 = vrot.slane %v511, %v519
      %v522 = vunpack.c.l.s4 1983009808
      %v523 = vunpack.c.0.s8 %v522
      %v524 = vlaneseq
      %v525 = vshrl.u32 %v524, 7
      %v526 = vsub.s32 %v523, %v525
      %v527 = vrot.slane %v513, %v526
      %528 = vrot.lane.b32.xlu0 %v520, 99
      %v529 = vpop.permute.xlu0 %528
      %530 = vrot.lane.b32.xlu0 %v527, 99
      %v531 = vpop.permute.xlu0 %530
      %v532 = vrot.slane %v529, 4
      %v533 = vrot.slane %v531, 4
      %v534 = vsel %vm192, %v532, %v533
      %vm535 = vcmask 809984
      %v536 = vsel %vm535, %v529, %v534
      %v537 = vsel %vm535, %v531, %v533
      %540 = vst [vmem:[#allocation2 + $0x48] sm:$0x33] %v536
      %541 = vst [vmem:[#allocation2 + $0x50] sm:$0x3] %v537
      %v542 = vld [vmem:[%s138] sm:$0xff]
      %v544 = vcombine.low %v542, %v542
      %v546 = vunpack.c.l.s4 1983009808
      %v547 = vunpack.c.0.s8 %v546
      %v548 = vlaneseq
      %v549 = vshrl.u32 %v548, 7
      %v550 = vsub.s32 %v547, %v549
      %v551 = vrot.slane %v544, %v550
      %v553 = vunpack.c.l.s4 1983009808
      %v554 = vunpack.c.0.s8 %v553
      %v555 = vlaneseq
      %v556 = vshrl.u32 %v555, 7
      %v557 = vsub.s32 %v554, %v556
      %v558 = vrot.slane %v542, %v557
      %559 = vrot.lane.b32.xlu0 %v551, 98
      %v560 = vpop.permute.xlu0 %559
      %561 = vrot.lane.b32.xlu0 %v558, 98
      %v562 = vpop.permute.xlu0 %561
      %v563 = vrot.slane %v560, 4
      %v564 = vrot.slane %v562, 4
      %v565 = vsel %vm192, %v563, %v564
      %vm566 = vcmask 801792
      %v567 = vsel %vm566, %v560, %v565
      %v568 = vsel %vm566, %v562, %v564
      %571 = vst [vmem:[#allocation2 + $0x48] sm:$0xcc] %v567
      %572 = vst [vmem:[#allocation2 + $0x50] sm:$0xc] %v568
      %v573 = vld [vmem:[%s138] sm:$0xff]
      %v575 = vcombine.high %v573, %v573
      %v577 = vunpack.c.l.s4 1983009808
      %v578 = vunpack.c.0.s8 %v577
      %v579 = vlaneseq
      %v580 = vshrl.u32 %v579, 7
      %v581 = vsub.s32 %v578, %v580
      %v582 = vrot.slane %v573, %v581
      %v584 = vunpack.c.l.s4 1983009808
      %v585 = vunpack.c.0.s8 %v584
      %v586 = vlaneseq
      %v587 = vshrl.u32 %v586, 7
      %v588 = vsub.s32 %v585, %v587
      %v589 = vrot.slane %v575, %v588
      %590 = vrot.lane.b32.xlu0 %v582, 80
      %v591 = vpop.permute.xlu0 %590
      %592 = vrot.lane.b32.xlu0 %v589, 80
      %v593 = vpop.permute.xlu0 %592
      %v594 = vrot.slane %v591, 4
      %v595 = vrot.slane %v593, 4
      %v596 = vsel %vm192, %v594, %v595
      %vm597 = vcmask 654336
      %v598 = vsel %vm597, %v591, %v596
      %v599 = vsel %vm597, %v593, %v595
      %602 = vst [vmem:[#allocation2 + $0x54] sm:$0x33] %v598
      %603 = vst [vmem:[#allocation2 + $0x5c] sm:$0x3] %v599
      %v604 = vld [vmem:[%s138] sm:$0xff]
      %v606 = vcombine.low %v604, %v604
      %v608 = vunpack.c.l.s4 1983009808
      %v609 = vunpack.c.0.s8 %v608
      %v610 = vlaneseq
      %v611 = vshrl.u32 %v610, 7
      %v612 = vsub.s32 %v609, %v611
      %v613 = vrot.slane %v606, %v612
      %v615 = vunpack.c.l.s4 1983009808
      %v616 = vunpack.c.0.s8 %v615
      %v617 = vlaneseq
      %v618 = vshrl.u32 %v617, 7
      %v619 = vsub.s32 %v616, %v618
      %v620 = vrot.slane %v604, %v619
      %621 = vrot.lane.b32.xlu0 %v613, 79
      %v622 = vpop.permute.xlu0 %621
      %623 = vrot.lane.b32.xlu0 %v620, 79
      %v624 = vpop.permute.xlu0 %623
      %v625 = vrot.slane %v622, 4
      %v626 = vrot.slane %v624, 4
      %v627 = vsel %vm192, %v625, %v626
      %vm628 = vcmask 646144
      %v629 = vsel %vm628, %v622, %v627
      %v630 = vsel %vm628, %v624, %v626
      %633 = vst [vmem:[#allocation2 + $0x54] sm:$0xcc] %v629
      %634 = vst [vmem:[#allocation2 + $0x5c] sm:$0xc] %v630
      %v635 = vld [vmem:[%s138] sm:$0xff]
      %v637 = vcombine.high %v635, %v635
      %v639 = vunpack.c.l.s4 1983009808
      %v640 = vunpack.c.0.s8 %v639
      %v641 = vlaneseq
      %v642 = vshrl.u32 %v641, 7
      %v643 = vsub.s32 %v640, %v642
      %v644 = vrot.slane %v635, %v643
      %v646 = vunpack.c.l.s4 1983009808
      %v647 = vunpack.c.0.s8 %v646
      %v648 = vlaneseq
      %v649 = vshrl.u32 %v648, 7
      %v650 = vsub.s32 %v647, %v649
      %v651 = vrot.slane %v637, %v650
      %652 = vrot.lane.b32.xlu0 %v644, 78
      %v653 = vpop.permute.xlu0 %652
      %654 = vrot.lane.b32.xlu0 %v651, 78
      %v655 = vpop.permute.xlu0 %654
      %v656 = vrot.slane %v653, 4
      %v657 = vrot.slane %v655, 4
      %v658 = vsel %vm192, %v656, %v657
      %vm659 = vcmask 637952
      %v660 = vsel %vm659, %v653, %v658
      %v661 = vsel %vm659, %v655, %v657
      %664 = vst [vmem:[#allocation2 + $0x60] sm:$0x33] %v660
      %665 = vst [vmem:[#allocation2 + $0x68] sm:$0x3] %v661
      %v666 = vld [vmem:[%s138] sm:$0xff]
      %v668 = vcombine.low %v666, %v666
      %v670 = vunpack.c.l.s4 1983009808
      %v671 = vunpack.c.0.s8 %v670
      %v672 = vlaneseq
      %v673 = vshrl.u32 %v672, 7
      %v674 = vsub.s32 %v671, %v673
      %v675 = vrot.slane %v668, %v674
      %v677 = vunpack.c.l.s4 1983009808
      %v678 = vunpack.c.0.s8 %v677
      %v679 = vlaneseq
      %v680 = vshrl.u32 %v679, 7
      %v681 = vsub.s32 %v678, %v680
      %v682 = vrot.slane %v666, %v681
      %683 = vrot.lane.b32.xlu0 %v675, 77
      %v684 = vpop.permute.xlu0 %683
      %685 = vrot.lane.b32.xlu0 %v682, 77
      %v686 = vpop.permute.xlu0 %685
      %v687 = vrot.slane %v684, 4
      %v688 = vrot.slane %v686, 4
      %v689 = vsel %vm192, %v687, %v688
      %vm690 = vcmask 629760
      %v691 = vsel %vm690, %v684, %v689
      %v692 = vsel %vm690, %v686, %v688
      %695 = vst [vmem:[#allocation2 + $0x60] sm:$0xcc] %v691
      %696 = vst [vmem:[#allocation2 + $0x68] sm:$0xc] %v692
      %v697 = vld [vmem:[%s138] sm:$0xff]
      %v699 = vcombine.high %v697, %v697
      %v701 = vunpack.c.l.s4 1983009808
      %v702 = vunpack.c.0.s8 %v701
      %v703 = vlaneseq
      %v704 = vshrl.u32 %v703, 7
      %v705 = vsub.s32 %v702, %v704
      %v706 = vrot.slane %v697, %v705
      %v708 = vunpack.c.l.s4 1983009808
      %v709 = vunpack.c.0.s8 %v708
      %v710 = vlaneseq
      %v711 = vshrl.u32 %v710, 7
      %v712 = vsub.s32 %v709, %v711
      %v713 = vrot.slane %v699, %v712
      %714 = vrot.lane.b32.xlu0 %v706, 76
      %v715 = vpop.permute.xlu0 %714
      %716 = vrot.lane.b32.xlu0 %v713, 76
      %v717 = vpop.permute.xlu0 %716
      %v718 = vrot.slane %v715, 4
      %v719 = vrot.slane %v717, 4
      %v720 = vsel %vm192, %v718, %v719
      %vm721 = vcmask 621568
      %v722 = vsel %vm721, %v715, %v720
      %v723 = vsel %vm721, %v717, %v719
      %726 = vst [vmem:[#allocation2 + $0x6c] sm:$0x33] %v722
      %727 = vst [vmem:[#allocation2 + $0x74] sm:$0x3] %v723
      %v728 = vld [vmem:[%s138] sm:$0xff]
      %v730 = vcombine.low %v728, %v728
      %v732 = vunpack.c.l.s4 1983009808
      %v733 = vunpack.c.0.s8 %v732
      %v734 = vlaneseq
      %v735 = vshrl.u32 %v734, 7
      %v736 = vsub.s32 %v733, %v735
      %v737 = vrot.slane %v730, %v736
      %v739 = vunpack.c.l.s4 1983009808
      %v740 = vunpack.c.0.s8 %v739
      %v741 = vlaneseq
      %v742 = vshrl.u32 %v741, 7
      %v743 = vsub.s32 %v740, %v742
      %v744 = vrot.slane %v728, %v743
      %745 = vrot.lane.b32.xlu0 %v737, 75
      %v746 = vpop.permute.xlu0 %745
      %747 = vrot.lane.b32.xlu0 %v744, 75
      %v748 = vpop.permute.xlu0 %747
      %v749 = vrot.slane %v746, 4
      %v750 = vrot.slane %v748, 4
      %v751 = vsel %vm192, %v749, %v750
      %vm752 = vcmask 613376
      %v753 = vsel %vm752, %v746, %v751
      %v754 = vsel %vm752, %v748, %v750
      %757 = vst [vmem:[#allocation2 + $0x6c] sm:$0xcc] %v753
      %758 = vst [vmem:[#allocation2 + $0x74] sm:$0xc] %v754
      %v759 = vld [vmem:[%s138] sm:$0xff]
      %v761 = vcombine.high %v759, %v759
      %v763 = vunpack.c.l.s4 1983009808
      %v764 = vunpack.c.0.s8 %v763
      %v765 = vlaneseq
      %v766 = vshrl.u32 %v765, 7
      %v767 = vsub.s32 %v764, %v766
      %v768 = vrot.slane %v759, %v767
      %v770 = vunpack.c.l.s4 1983009808
      %v771 = vunpack.c.0.s8 %v770
      %v772 = vlaneseq
      %v773 = vshrl.u32 %v772, 7
      %v774 = vsub.s32 %v771, %v773
      %v775 = vrot.slane %v761, %v774
      %776 = vrot.lane.b32.xlu0 %v768, 74
      %v777 = vpop.permute.xlu0 %776
      %778 = vrot.lane.b32.xlu0 %v775, 74
      %v779 = vpop.permute.xlu0 %778
      %v780 = vrot.slane %v777, 4
      %v781 = vrot.slane %v779, 4
      %v782 = vsel %vm192, %v780, %v781
      %vm783 = vcmask 605184
      %v784 = vsel %vm783, %v777, %v782
      %v785 = vsel %vm783, %v779, %v781
      %788 = vst [vmem:[#allocation2 + $0x78] sm:$0x33] %v784
      %789 = vst [vmem:[#allocation2 + $0x80] sm:$0x3] %v785
      %v790 = vld [vmem:[%s138] sm:$0xff]
      %v792 = vcombine.low %v790, %v790
      %v794 = vunpack.c.l.s4 1983009808
      %v795 = vunpack.c.0.s8 %v794
      %v796 = vlaneseq
      %v797 = vshrl.u32 %v796, 7
      %v798 = vsub.s32 %v795, %v797
      %v799 = vrot.slane %v792, %v798
      %v801 = vunpack.c.l.s4 1983009808
      %v802 = vunpack.c.0.s8 %v801
      %v803 = vlaneseq
      %v804 = vshrl.u32 %v803, 7
      %v805 = vsub.s32 %v802, %v804
      %v806 = vrot.slane %v790, %v805
      %807 = vrot.lane.b32.xlu0 %v799, 56
      %v808 = vpop.permute.xlu0 %807
      %809 = vrot.lane.b32.xlu0 %v806, 56
      %v810 = vpop.permute.xlu0 %809
      %v811 = vrot.slane %v808, 4
      %v812 = vrot.slane %v810, 4
      %v813 = vsel %vm192, %v811, %v812
      %vm814 = vcmask 457728
      %v815 = vsel %vm814, %v808, %v813
      %v816 = vsel %vm814, %v810, %v812
      %819 = vst [vmem:[#allocation2 + $0x78] sm:$0xcc] %v815
      %820 = vst [vmem:[#allocation2 + $0x80] sm:$0xc] %v816
      %v821 = vld [vmem:[%s138] sm:$0xff]
      %v823 = vcombine.high %v821, %v821
      %v825 = vunpack.c.l.s4 1983009808
      %v826 = vunpack.c.0.s8 %v825
      %v827 = vlaneseq
      %v828 = vshrl.u32 %v827, 7
      %v829 = vsub.s32 %v826, %v828
      %v830 = vrot.slane %v821, %v829
      %v832 = vunpack.c.l.s4 1983009808
      %v833 = vunpack.c.0.s8 %v832
      %v834 = vlaneseq
      %v835 = vshrl.u32 %v834, 7
      %v836 = vsub.s32 %v833, %v835
      %v837 = vrot.slane %v823, %v836
      %838 = vrot.lane.b32.xlu0 %v830, 55
      %v839 = vpop.permute.xlu0 %838
      %840 = vrot.lane.b32.xlu0 %v837, 55
      %v841 = vpop.permute.xlu0 %840
      %v842 = vrot.slane %v839, 4
      %v843 = vrot.slane %v841, 4
      %v844 = vsel %vm192, %v842, %v843
      %vm845 = vcmask 449536
      %v846 = vsel %vm845, %v839, %v844
      %v847 = vsel %vm845, %v841, %v843
      %850 = vst [vmem:[#allocation2 + $0x84] sm:$0x33] %v846
      %851 = vst [vmem:[#allocation2 + $0x8c] sm:$0x3] %v847
      %v852 = vld [vmem:[%s138] sm:$0xff]
      %v854 = vcombine.low %v852, %v852
      %v856 = vunpack.c.l.s4 1983009808
      %v857 = vunpack.c.0.s8 %v856
      %v858 = vlaneseq
      %v859 = vshrl.u32 %v858, 7
      %v860 = vsub.s32 %v857, %v859
      %v861 = vrot.slane %v854, %v860
      %v863 = vunpack.c.l.s4 1983009808
      %v864 = vunpack.c.0.s8 %v863
      %v865 = vlaneseq
      %v866 = vshrl.u32 %v865, 7
      %v867 = vsub.s32 %v864, %v866
      %v868 = vrot.slane %v852, %v867
      %869 = vrot.lane.b32.xlu0 %v861, 54
      %v870 = vpop.permute.xlu0 %869
      %871 = vrot.lane.b32.xlu0 %v868, 54
      %v872 = vpop.permute.xlu0 %871
      %v873 = vrot.slane %v870, 4
      %v874 = vrot.slane %v872, 4
      %v875 = vsel %vm192, %v873, %v874
      %vm876 = vcmask 441344
      %v877 = vsel %vm876, %v870, %v875
      %v878 = vsel %vm876, %v872, %v874
      %881 = vst [vmem:[#allocation2 + $0x84] sm:$0xcc] %v877
      %882 = vst [vmem:[#allocation2 + $0x8c] sm:$0xc] %v878
      %v883 = vld [vmem:[%s138] sm:$0xff]
      %v885 = vcombine.high %v883, %v883
      %v887 = vunpack.c.l.s4 1983009808
      %v888 = vunpack.c.0.s8 %v887
      %v889 = vlaneseq
      %v890 = vshrl.u32 %v889, 7
      %v891 = vsub.s32 %v888, %v890
      %v892 = vrot.slane %v883, %v891
      %v894 = vunpack.c.l.s4 1983009808
      %v895 = vunpack.c.0.s8 %v894
      %v896 = vlaneseq
      %v897 = vshrl.u32 %v896, 7
      %v898 = vsub.s32 %v895, %v897
      %v899 = vrot.slane %v885, %v898
      %900 = vrot.lane.b32.xlu0 %v892, 53
      %v901 = vpop.permute.xlu0 %900
      %902 = vrot.lane.b32.xlu0 %v899, 53
      %v903 = vpop.permute.xlu0 %902
      %v904 = vrot.slane %v901, 4
      %v905 = vrot.slane %v903, 4
      %v906 = vsel %vm192, %v904, %v905
      %vm907 = vcmask 433152
      %v908 = vsel %vm907, %v901, %v906
      %v909 = vsel %vm907, %v903, %v905
      %912 = vst [vmem:[#allocation2 + $0x90] sm:$0x33] %v908
      %913 = vst [vmem:[#allocation2 + $0x98] sm:$0x3] %v909
      %v914 = vld [vmem:[%s138] sm:$0xff]
      %v916 = vcombine.low %v914, %v914
      %v918 = vunpack.c.l.s4 1983009808
      %v919 = vunpack.c.0.s8 %v918
      %v920 = vlaneseq
      %v921 = vshrl.u32 %v920, 7
      %v922 = vsub.s32 %v919, %v921
      %v923 = vrot.slane %v916, %v922
      %v925 = vunpack.c.l.s4 1983009808
      %v926 = vunpack.c.0.s8 %v925
      %v927 = vlaneseq
      %v928 = vshrl.u32 %v927, 7
      %v929 = vsub.s32 %v926, %v928
      %v930 = vrot.slane %v914, %v929
      %931 = vrot.lane.b32.xlu0 %v923, 52
      %v932 = vpop.permute.xlu0 %931
      %933 = vrot.lane.b32.xlu0 %v930, 52
      %v934 = vpop.permute.xlu0 %933
      %v935 = vrot.slane %v932, 4
      %v936 = vrot.slane %v934, 4
      %v937 = vsel %vm192, %v935, %v936
      %vm938 = vcmask 424960
      %v939 = vsel %vm938, %v932, %v937
      %v940 = vsel %vm938, %v934, %v936
      %943 = vst [vmem:[#allocation2 + $0x90] sm:$0xcc] %v939
      %944 = vst [vmem:[#allocation2 + $0x98] sm:$0xc] %v940
      %v945 = vld [vmem:[%s138] sm:$0xff]
      %v947 = vcombine.high %v945, %v945
      %v949 = vunpack.c.l.s4 1983009808
      %v950 = vunpack.c.0.s8 %v949
      %v951 = vlaneseq
      %v952 = vshrl.u32 %v951, 7
      %v953 = vsub.s32 %v950, %v952
      %v954 = vrot.slane %v945, %v953
      %v956 = vunpack.c.l.s4 1983009808
      %v957 = vunpack.c.0.s8 %v956
      %v958 = vlaneseq
      %v959 = vshrl.u32 %v958, 7
      %v960 = vsub.s32 %v957, %v959
      %v961 = vrot.slane %v947, %v960
      %962 = vrot.lane.b32.xlu0 %v954, 51
      %v963 = vpop.permute.xlu0 %962
      %964 = vrot.lane.b32.xlu0 %v961, 51
      %v965 = vpop.permute.xlu0 %964
      %v966 = vrot.slane %v963, 4
      %v967 = vrot.slane %v965, 4
      %v968 = vsel %vm192, %v966, %v967
      %vm969 = vcmask 416768
      %v970 = vsel %vm969, %v963, %v968
      %v971 = vsel %vm969, %v965, %v967
      %974 = vst [vmem:[#allocation2 + $0x9c] sm:$0x33] %v970
      %975 = vst [vmem:[#allocation2 + $0xa4] sm:$0x3] %v971
      %v976 = vld [vmem:[%s138] sm:$0xff]
      %v978 = vcombine.low %v976, %v976
      %v980 = vunpack.c.l.s4 1983009808
      %v981 = vunpack.c.0.s8 %v980
      %v982 = vlaneseq
      %v983 = vshrl.u32 %v982, 7
      %v984 = vsub.s32 %v981, %v983
      %v985 = vrot.slane %v978, %v984
      %v987 = vunpack.c.l.s4 1983009808
      %v988 = vunpack.c.0.s8 %v987
      %v989 = vlaneseq
      %v990 = vshrl.u32 %v989, 7
      %v991 = vsub.s32 %v988, %v990
      %v992 = vrot.slane %v976, %v991
      %993 = vrot.lane.b32.xlu0 %v985, 50
      %v994 = vpop.permute.xlu0 %993
      %995 = vrot.lane.b32.xlu0 %v992, 50
      %v996 = vpop.permute.xlu0 %995
      %v997 = vrot.slane %v994, 4
      %v998 = vrot.slane %v996, 4
      %v999 = vsel %vm192, %v997, %v998
      %vm1000 = vcmask 408576
      %v1001 = vsel %vm1000, %v994, %v999
      %v1002 = vsel %vm1000, %v996, %v998
      %1005 = vst [vmem:[#allocation2 + $0x9c] sm:$0xcc] %v1001
      %1006 = vst [vmem:[#allocation2 + $0xa4] sm:$0xc] %v1002
      %v1007 = vld [vmem:[%s138] sm:$0xff]
      %v1009 = vcombine.high %v1007, %v1007
      %v1011 = vunpack.c.l.s4 1983009808
      %v1012 = vunpack.c.0.s8 %v1011
      %v1013 = vlaneseq
      %v1014 = vshrl.u32 %v1013, 7
      %v1015 = vsub.s32 %v1012, %v1014
      %v1016 = vrot.slane %v1007, %v1015
      %v1018 = vunpack.c.l.s4 1983009808
      %v1019 = vunpack.c.0.s8 %v1018
      %v1020 = vlaneseq
      %v1021 = vshrl.u32 %v1020, 7
      %v1022 = vsub.s32 %v1019, %v1021
      %v1023 = vrot.slane %v1009, %v1022
      %1024 = vrot.lane.b32.xlu0 %v1016, 32
      %v1025 = vpop.permute.xlu0 %1024
      %1026 = vrot.lane.b32.xlu0 %v1023, 32
      %v1027 = vpop.permute.xlu0 %1026
      %v1028 = vrot.slane %v1025, 4
      %v1029 = vrot.slane %v1027, 4
      %v1030 = vsel %vm192, %v1028, %v1029
      %vm1031 = vcmask 261120
      %v1032 = vsel %vm1031, %v1025, %v1030
      %v1033 = vsel %vm1031, %v1027, %v1029
      %1036 = vst [vmem:[#allocation2 + $0xa8] sm:$0x33] %v1032
      %1037 = vst [vmem:[#allocation2 + $0xb0] sm:$0x3] %v1033
      %v1038 = vld [vmem:[%s138] sm:$0xff]
      %v1040 = vcombine.low %v1038, %v1038
      %v1042 = vunpack.c.l.s4 1983009808
      %v1043 = vunpack.c.0.s8 %v1042
      %v1044 = vlaneseq
      %v1045 = vshrl.u32 %v1044, 7
      %v1046 = vsub.s32 %v1043, %v1045
      %v1047 = vrot.slane %v1040, %v1046
      %v1049 = vunpack.c.l.s4 1983009808
      %v1050 = vunpack.c.0.s8 %v1049
      %v1051 = vlaneseq
      %v1052 = vshrl.u32 %v1051, 7
      %v1053 = vsub.s32 %v1050, %v1052
      %v1054 = vrot.slane %v1038, %v1053
      %1055 = vrot.lane.b32.xlu0 %v1047, 31
      %v1056 = vpop.permute.xlu0 %1055
      %1057 = vrot.lane.b32.xlu0 %v1054, 31
      %v1058 = vpop.permute.xlu0 %1057
      %v1059 = vrot.slane %v1056, 4
      %v1060 = vrot.slane %v1058, 4
      %v1061 = vsel %vm192, %v1059, %v1060
      %vm1062 = vcmask 252928
      %v1063 = vsel %vm1062, %v1056, %v1061
      %v1064 = vsel %vm1062, %v1058, %v1060
      %1067 = vst [vmem:[#allocation2 + $0xa8] sm:$0xcc] %v1063
      %1068 = vst [vmem:[#allocation2 + $0xb0] sm:$0xc] %v1064
      %v1069 = vld [vmem:[%s138] sm:$0xff]
      %v1071 = vcombine.high %v1069, %v1069
      %v1073 = vunpack.c.l.s4 1983009808
      %v1074 = vunpack.c.0.s8 %v1073
      %v1075 = vlaneseq
      %v1076 = vshrl.u32 %v1075, 7
      %v1077 = vsub.s32 %v1074, %v1076
      %v1078 = vrot.slane %v1069, %v1077
      %v1080 = vunpack.c.l.s4 1983009808
      %v1081 = vunpack.c.0.s8 %v1080
      %v1082 = vlaneseq
      %v1083 = vshrl.u32 %v1082, 7
      %v1084 = vsub.s32 %v1081, %v1083
      %v1085 = vrot.slane %v1071, %v1084
      %1086 = vrot.lane.b32.xlu0 %v1078, 30
      %v1087 = vpop.permute.xlu0 %1086
      %1088 = vrot.lane.b32.xlu0 %v1085, 30
      %v1089 = vpop.permute.xlu0 %1088
      %v1090 = vrot.slane %v1087, 4
      %v1091 = vrot.slane %v1089, 4
      %v1092 = vsel %vm192, %v1090, %v1091
      %vm1093 = vcmask 244736
      %v1094 = vsel %vm1093, %v1087, %v1092
      %v1095 = vsel %vm1093, %v1089, %v1091
      %1098 = vst [vmem:[#allocation2 + $0xb4] sm:$0x33] %v1094
      %1099 = vst [vmem:[#allocation2 + $0xbc] sm:$0x3] %v1095
      %v1100 = vld [vmem:[%s138] sm:$0xff]
      %v1102 = vcombine.low %v1100, %v1100
      %v1104 = vunpack.c.l.s4 1983009808
      %v1105 = vunpack.c.0.s8 %v1104
      %v1106 = vlaneseq
      %v1107 = vshrl.u32 %v1106, 7
      %v1108 = vsub.s32 %v1105, %v1107
      %v1109 = vrot.slane %v1102, %v1108
      %v1111 = vunpack.c.l.s4 1983009808
      %v1112 = vunpack.c.0.s8 %v1111
      %v1113 = vlaneseq
      %v1114 = vshrl.u32 %v1113, 7
      %v1115 = vsub.s32 %v1112, %v1114
      %v1116 = vrot.slane %v1100, %v1115
      %1117 = vrot.lane.b32.xlu0 %v1109, 29
      %v1118 = vpop.permute.xlu0 %1117
      %1119 = vrot.lane.b32.xlu0 %v1116, 29
      %v1120 = vpop.permute.xlu0 %1119
      %v1121 = vrot.slane %v1118, 4
      %v1122 = vrot.slane %v1120, 4
      %v1123 = vsel %vm192, %v1121, %v1122
      %vm1124 = vcmask 236544
      %v1125 = vsel %vm1124, %v1118, %v1123
      %v1126 = vsel %vm1124, %v1120, %v1122
      %1129 = vst [vmem:[#allocation2 + $0xb4] sm:$0xcc] %v1125
      %1130 = vst [vmem:[#allocation2 + $0xbc] sm:$0xc] %v1126
      %v1131 = vld [vmem:[%s138] sm:$0xff]
      %v1133 = vcombine.high %v1131, %v1131
      %v1135 = vunpack.c.l.s4 1983009808
      %v1136 = vunpack.c.0.s8 %v1135
      %v1137 = vlaneseq
      %v1138 = vshrl.u32 %v1137, 7
      %v1139 = vsub.s32 %v1136, %v1138
      %v1140 = vrot.slane %v1131, %v1139
      %v1142 = vunpack.c.l.s4 1983009808
      %v1143 = vunpack.c.0.s8 %v1142
      %v1144 = vlaneseq
      %v1145 = vshrl.u32 %v1144, 7
      %v1146 = vsub.s32 %v1143, %v1145
      %v1147 = vrot.slane %v1133, %v1146
      %1148 = vrot.lane.b32.xlu0 %v1140, 28
      %v1149 = vpop.permute.xlu0 %1148
      %1150 = vrot.lane.b32.xlu0 %v1147, 28
      %v1151 = vpop.permute.xlu0 %1150
      %v1152 = vrot.slane %v1149, 4
      %v1153 = vrot.slane %v1151, 4
      %v1154 = vsel %vm192, %v1152, %v1153
      %vm1155 = vcmask 228352
      %v1156 = vsel %vm1155, %v1149, %v1154
      %v1157 = vsel %vm1155, %v1151, %v1153
      %1160 = vst [vmem:[#allocation2 + $0xc0] sm:$0x33] %v1156
      %1161 = vst [vmem:[#allocation2 + $0xc8] sm:$0x3] %v1157
      %v1162 = vld [vmem:[%s138] sm:$0xff]
      %v1164 = vcombine.low %v1162, %v1162
      %v1166 = vunpack.c.l.s4 1983009808
      %v1167 = vunpack.c.0.s8 %v1166
      %v1168 = vlaneseq
      %v1169 = vshrl.u32 %v1168, 7
      %v1170 = vsub.s32 %v1167, %v1169
      %v1171 = vrot.slane %v1164, %v1170
      %v1173 = vunpack.c.l.s4 1983009808
      %v1174 = vunpack.c.0.s8 %v1173
      %v1175 = vlaneseq
      %v1176 = vshrl.u32 %v1175, 7
      %v1177 = vsub.s32 %v1174, %v1176
      %v1178 = vrot.slane %v1162, %v1177
      %1179 = vrot.lane.b32.xlu0 %v1171, 27
      %v1180 = vpop.permute.xlu0 %1179
      %1181 = vrot.lane.b32.xlu0 %v1178, 27
      %v1182 = vpop.permute.xlu0 %1181
      %v1183 = vrot.slane %v1180, 4
      %v1184 = vrot.slane %v1182, 4
      %v1185 = vsel %vm192, %v1183, %v1184
      %vm1186 = vcmask 220160
      %v1187 = vsel %vm1186, %v1180, %v1185
      %v1188 = vsel %vm1186, %v1182, %v1184
      %1191 = vst [vmem:[#allocation2 + $0xc0] sm:$0xcc] %v1187
      %1192 = vst [vmem:[#allocation2 + $0xc8] sm:$0xc] %v1188
      %v1193 = vld [vmem:[%s138] sm:$0xff]
      %v1195 = vcombine.high %v1193, %v1193
      %v1197 = vunpack.c.l.s4 1983009808
      %v1198 = vunpack.c.0.s8 %v1197
      %v1199 = vlaneseq
      %v1200 = vshrl.u32 %v1199, 7
      %v1201 = vsub.s32 %v1198, %v1200
      %v1202 = vrot.slane %v1193, %v1201
      %v1204 = vunpack.c.l.s4 1983009808
      %v1205 = vunpack.c.0.s8 %v1204
      %v1206 = vlaneseq
      %v1207 = vshrl.u32 %v1206, 7
      %v1208 = vsub.s32 %v1205, %v1207
      %v1209 = vrot.slane %v1195, %v1208
      %1210 = vrot.lane.b32.xlu0 %v1202, 26
      %v1211 = vpop.permute.xlu0 %1210
      %1212 = vrot.lane.b32.xlu0 %v1209, 26
      %v1213 = vpop.permute.xlu0 %1212
      %v1214 = vrot.slane %v1211, 4
      %v1215 = vrot.slane %v1213, 4
      %v1216 = vsel %vm192, %v1214, %v1215
      %vm1217 = vcmask 211968
      %v1218 = vsel %vm1217, %v1211, %v1216
      %v1219 = vsel %vm1217, %v1213, %v1215
      %1222 = vst [vmem:[#allocation2 + $0xcc] sm:$0x33] %v1218
      %1223 = vst [vmem:[#allocation2 + $0xd4] sm:$0x3] %v1219
      %v1224 = vld [vmem:[%s138] sm:$0xff]
      %v1226 = vcombine.low %v1224, %v1224
      %v1228 = vunpack.c.l.s4 1983009808
      %v1229 = vunpack.c.0.s8 %v1228
      %v1230 = vlaneseq
      %v1231 = vshrl.u32 %v1230, 7
      %v1232 = vsub.s32 %v1229, %v1231
      %v1233 = vrot.slane %v1226, %v1232
      %v1235 = vunpack.c.l.s4 1983009808
      %v1236 = vunpack.c.0.s8 %v1235
      %v1237 = vlaneseq
      %v1238 = vshrl.u32 %v1237, 7
      %v1239 = vsub.s32 %v1236, %v1238
      %v1240 = vrot.slane %v1224, %v1239
      %1241 = vrot.lane.b32.xlu0 %v1233, 8
      %v1242 = vpop.permute.xlu0 %1241
      %1243 = vrot.lane.b32.xlu0 %v1240, 8
      %v1244 = vpop.permute.xlu0 %1243
      %v1245 = vrot.slane %v1242, 4
      %v1246 = vrot.slane %v1244, 4
      %v1247 = vsel %vm192, %v1245, %v1246
      %vm1248 = vcmask 64512
      %v1249 = vsel %vm1248, %v1242, %v1247
      %v1250 = vsel %vm1248, %v1244, %v1246
      %1253 = vst [vmem:[#allocation2 + $0xcc] sm:$0xcc] %v1249
      %1254 = vst [vmem:[#allocation2 + $0xd4] sm:$0xc] %v1250
      %v1255 = vld [vmem:[%s138] sm:$0xff]
      %v1257 = vcombine.high %v1255, %v1255
      %v1259 = vunpack.c.l.s4 1983009808
      %v1260 = vunpack.c.0.s8 %v1259
      %v1261 = vlaneseq
      %v1262 = vshrl.u32 %v1261, 7
      %v1263 = vsub.s32 %v1260, %v1262
      %v1264 = vrot.slane %v1255, %v1263
      %v1266 = vunpack.c.l.s4 1983009808
      %v1267 = vunpack.c.0.s8 %v1266
      %v1268 = vlaneseq
      %v1269 = vshrl.u32 %v1268, 7
      %v1270 = vsub.s32 %v1267, %v1269
      %v1271 = vrot.slane %v1257, %v1270
      %1272 = vrot.lane.b32.xlu0 %v1264, 7
      %v1273 = vpop.permute.xlu0 %1272
      %1274 = vrot.lane.b32.xlu0 %v1271, 7
      %v1275 = vpop.permute.xlu0 %1274
      %v1276 = vrot.slane %v1273, 4
      %v1277 = vrot.slane %v1275, 4
      %v1278 = vsel %vm192, %v1276, %v1277
      %vm1279 = vcmask 56320
      %v1280 = vsel %vm1279, %v1273, %v1278
      %v1281 = vsel %vm1279, %v1275, %v1277
      %1284 = vst [vmem:[#allocation2 + $0xd8] sm:$0x33] %v1280
      %1285 = vst [vmem:[#allocation2 + $0xe0] sm:$0x3] %v1281
      %v1286 = vld [vmem:[%s138] sm:$0xff]
      %v1288 = vcombine.low %v1286, %v1286
      %v1290 = vunpack.c.l.s4 1983009808
      %v1291 = vunpack.c.0.s8 %v1290
      %v1292 = vlaneseq
      %v1293 = vshrl.u32 %v1292, 7
      %v1294 = vsub.s32 %v1291, %v1293
      %v1295 = vrot.slane %v1288, %v1294
      %v1297 = vunpack.c.l.s4 1983009808
      %v1298 = vunpack.c.0.s8 %v1297
      %v1299 = vlaneseq
      %v1300 = vshrl.u32 %v1299, 7
      %v1301 = vsub.s32 %v1298, %v1300
      %v1302 = vrot.slane %v1286, %v1301
      %1303 = vrot.lane.b32.xlu0 %v1295, 6
      %v1304 = vpop.permute.xlu0 %1303
      %1305 = vrot.lane.b32.xlu0 %v1302, 6
      %v1306 = vpop.permute.xlu0 %1305
      %v1307 = vrot.slane %v1304, 4
      %v1308 = vrot.slane %v1306, 4
      %v1309 = vsel %vm192, %v1307, %v1308
      %vm1310 = vcmask 48128
      %v1311 = vsel %vm1310, %v1304, %v1309
      %v1312 = vsel %vm1310, %v1306, %v1308
      %1315 = vst [vmem:[#allocation2 + $0xd8] sm:$0xcc] %v1311
      %1316 = vst [vmem:[#allocation2 + $0xe0] sm:$0xc] %v1312
      %v1317 = vld [vmem:[%s138] sm:$0xff]
      %v1319 = vcombine.high %v1317, %v1317
      %v1321 = vunpack.c.l.s4 1983009808
      %v1322 = vunpack.c.0.s8 %v1321
      %v1323 = vlaneseq
      %v1324 = vshrl.u32 %v1323, 7
      %v1325 = vsub.s32 %v1322, %v1324
      %v1326 = vrot.slane %v1317, %v1325
      %v1328 = vunpack.c.l.s4 1983009808
      %v1329 = vunpack.c.0.s8 %v1328
      %v1330 = vlaneseq
      %v1331 = vshrl.u32 %v1330, 7
      %v1332 = vsub.s32 %v1329, %v1331
      %v1333 = vrot.slane %v1319, %v1332
      %1334 = vrot.lane.b32.xlu0 %v1326, 5
      %v1335 = vpop.permute.xlu0 %1334
      %1336 = vrot.lane.b32.xlu0 %v1333, 5
      %v1337 = vpop.permute.xlu0 %1336
      %v1338 = vrot.slane %v1335, 4
      %v1339 = vrot.slane %v1337, 4
      %v1340 = vsel %vm192, %v1338, %v1339
      %vm1341 = vcmask 39936
      %v1342 = vsel %vm1341, %v1335, %v1340
      %v1343 = vsel %vm1341, %v1337, %v1339
      %1346 = vst [vmem:[#allocation2 + $0xe4] sm:$0x33] %v1342
      %1347 = vst [vmem:[#allocation2 + $0xec] sm:$0x3] %v1343
      %v1348 = vld [vmem:[%s138] sm:$0xff]
      %v1350 = vcombine.low %v1348, %v1348
      %v1352 = vunpack.c.l.s4 1983009808
      %v1353 = vunpack.c.0.s8 %v1352
      %v1354 = vlaneseq
      %v1355 = vshrl.u32 %v1354, 7
      %v1356 = vsub.s32 %v1353, %v1355
      %v1357 = vrot.slane %v1350, %v1356
      %v1359 = vunpack.c.l.s4 1983009808
      %v1360 = vunpack.c.0.s8 %v1359
      %v1361 = vlaneseq
      %v1362 = vshrl.u32 %v1361, 7
      %v1363 = vsub.s32 %v1360, %v1362
      %v1364 = vrot.slane %v1348, %v1363
      %1365 = vrot.lane.b32.xlu0 %v1357, 4
      %v1366 = vpop.permute.xlu0 %1365
      %1367 = vrot.lane.b32.xlu0 %v1364, 4
      %v1368 = vpop.permute.xlu0 %1367
      %v1369 = vrot.slane %v1366, 4
      %v1370 = vrot.slane %v1368, 4
      %v1371 = vsel %vm192, %v1369, %v1370
      %vm1372 = vcmask 31744
      %v1373 = vsel %vm1372, %v1366, %v1371
      %v1374 = vsel %vm1372, %v1368, %v1370
      %1377 = vst [vmem:[#allocation2 + $0xe4] sm:$0xcc] %v1373
      %1378 = vst [vmem:[#allocation2 + $0xec] sm:$0xc] %v1374
      %v1379 = vld [vmem:[%s138] sm:$0xff]
      %v1381 = vcombine.high %v1379, %v1379
      %v1383 = vunpack.c.l.s4 1983009808
      %v1384 = vunpack.c.0.s8 %v1383
      %v1385 = vlaneseq
      %v1386 = vshrl.u32 %v1385, 7
      %v1387 = vsub.s32 %v1384, %v1386
      %v1388 = vrot.slane %v1379, %v1387
      %v1390 = vunpack.c.l.s4 1983009808
      %v1391 = vunpack.c.0.s8 %v1390
      %v1392 = vlaneseq
      %v1393 = vshrl.u32 %v1392, 7
      %v1394 = vsub.s32 %v1391, %v1393
      %v1395 = vrot.slane %v1381, %v1394
      %1396 = vrot.lane.b32.xlu0 %v1388, 3
      %v1397 = vpop.permute.xlu0 %1396
      %1398 = vrot.lane.b32.xlu0 %v1395, 3
      %v1399 = vpop.permute.xlu0 %1398
      %v1400 = vrot.slane %v1397, 4
      %v1401 = vrot.slane %v1399, 4
      %v1402 = vsel %vm192, %v1400, %v1401
      %vm1403 = vcmask 23552
      %v1404 = vsel %vm1403, %v1397, %v1402
      %v1405 = vsel %vm1403, %v1399, %v1401
      %1408 = vst [vmem:[#allocation2 + $0xf0] sm:$0x33] %v1404
      %1409 = vst [vmem:[#allocation2 + $0xf8] sm:$0x3] %v1405
      %v1410 = vld [vmem:[%s138] sm:$0xff]
      %v1412 = vcombine.low %v1410, %v1410
      %v1414 = vunpack.c.l.s4 1983009808
      %v1415 = vunpack.c.0.s8 %v1414
      %v1416 = vlaneseq
      %v1417 = vshrl.u32 %v1416, 7
      %v1418 = vsub.s32 %v1415, %v1417
      %v1419 = vrot.slane %v1412, %v1418
      %v1421 = vunpack.c.l.s4 1983009808
      %v1422 = vunpack.c.0.s8 %v1421
      %v1423 = vlaneseq
      %v1424 = vshrl.u32 %v1423, 7
      %v1425 = vsub.s32 %v1422, %v1424
      %v1426 = vrot.slane %v1410, %v1425
      %1427 = vrot.lane.b32.xlu0 %v1419, 2
      %v1428 = vpop.permute.xlu0 %1427
      %1429 = vrot.lane.b32.xlu0 %v1426, 2
      %v1430 = vpop.permute.xlu0 %1429
      %v1431 = vrot.slane %v1428, 4
      %v1432 = vrot.slane %v1430, 4
      %v1433 = vsel %vm192, %v1431, %v1432
      %vm1434 = vcmask 15360
      %v1435 = vsel %vm1434, %v1428, %v1433
      %v1436 = vsel %vm1434, %v1430, %v1432
      %1439 = vst [vmem:[#allocation2 + $0xf0] sm:$0xcc] %v1435
      %1440 = vst [vmem:[#allocation2 + $0xf8] sm:$0xc] %v1436
      %v1441 = vld [vmem:[%s138 + $0x2] sm:$0xff]
      %v1443 = vcombine.high %v1441, %v1441
      %v1445 = vunpack.c.l.s4 1983009808
      %v1446 = vunpack.c.0.s8 %v1445
      %v1447 = vlaneseq
      %v1448 = vshrl.u32 %v1447, 7
      %v1449 = vsub.s32 %v1446, %v1448
      %v1450 = vrot.slane %v1441, %v1449
      %v1452 = vunpack.c.l.s4 1983009808
      %v1453 = vunpack.c.0.s8 %v1452
      %v1454 = vlaneseq
      %v1455 = vshrl.u32 %v1454, 7
      %v1456 = vsub.s32 %v1453, %v1455
      %v1457 = vrot.slane %v1443, %v1456
      %1458 = vrot.lane.b32.xlu0 %v1450, 112
      %v1459 = vpop.permute.xlu0 %1458
      %1460 = vrot.lane.b32.xlu0 %v1457, 112
      %v1461 = vpop.permute.xlu0 %1460
      %v1462 = vrot.slane %v1459, 4
      %v1463 = vrot.slane %v1461, 4
      %v1464 = vsel %vm192, %v1462, %v1463
      %vm1465 = vcmask 916480
      %v1466 = vsel %vm1465, %v1459, %v1464
      %v1467 = vsel %vm1465, %v1461, %v1463
      %1470 = vst [vmem:[#allocation2 + $0xfc] sm:$0x33] %v1466
      %1471 = vst [vmem:[#allocation2 + $0x104] sm:$0x3] %v1467
      %v1472 = vld [vmem:[%s138 + $0x2] sm:$0xff]
      %v1474 = vcombine.low %v1472, %v1472
      %v1476 = vunpack.c.l.s4 1983009808
      %v1477 = vunpack.c.0.s8 %v1476
      %v1478 = vlaneseq
      %v1479 = vshrl.u32 %v1478, 7
      %v1480 = vsub.s32 %v1477, %v1479
      %v1481 = vrot.slane %v1474, %v1480
      %v1483 = vunpack.c.l.s4 1983009808
      %v1484 = vunpack.c.0.s8 %v1483
      %v1485 = vlaneseq
      %v1486 = vshrl.u32 %v1485, 7
      %v1487 = vsub.s32 %v1484, %v1486
      %v1488 = vrot.slane %v1472, %v1487
      %1489 = vrot.lane.b32.xlu0 %v1481, 111
      %v1490 = vpop.permute.xlu0 %1489
      %1491 = vrot.lane.b32.xlu0 %v1488, 111
      %v1492 = vpop.permute.xlu0 %1491
      %v1493 = vrot.slane %v1490, 4
      %v1494 = vrot.slane %v1492, 4
      %v1495 = vsel %vm192, %v1493, %v1494
      %vm1496 = vcmask 908288
      %v1497 = vsel %vm1496, %v1490, %v1495
      %v1498 = vsel %vm1496, %v1492, %v1494
      %1501 = vst [vmem:[#allocation2 + $0xfc] sm:$0xcc] %v1497
      %1502 = vst [vmem:[#allocation2 + $0x104] sm:$0xc] %v1498
      %v1503 = vld [vmem:[%s138 + $0x2] sm:$0xff]
      %v1505 = vcombine.high %v1503, %v1503
      %v1507 = vunpack.c.l.s4 1983009808
      %v1508 = vunpack.c.0.s8 %v1507
      %v1509 = vlaneseq
      %v1510 = vshrl.u32 %v1509, 7
      %v1511 = vsub.s32 %v1508, %v1510
      %v1512 = vrot.slane %v1503, %v1511
      %v1514 = vunpack.c.l.s4 1983009808
      %v1515 = vunpack.c.0.s8 %v1514
      %v1516 = vlaneseq
      %v1517 = vshrl.u32 %v1516, 7
      %v1518 = vsub.s32 %v1515, %v1517
      %v1519 = vrot.slane %v1505, %v1518
      %1520 = vrot.lane.b32.xlu0 %v1512, 110
      %v1521 = vpop.permute.xlu0 %1520
      %1522 = vrot.lane.b32.xlu0 %v1519, 110
      %v1523 = vpop.permute.xlu0 %1522
      %v1524 = vrot.slane %v1521, 4
      %v1525 = vrot.slane %v1523, 4
      %v1526 = vsel %vm192, %v1524, %v1525
      %vm1527 = vcmask 900096
      %v1528 = vsel %vm1527, %v1521, %v1526
      %v1529 = vsel %vm1527, %v1523, %v1525
      %1532 = vst [vmem:[#allocation2 + $0x108] sm:$0x33] %v1528
      %1533 = vst [vmem:[#allocation2 + $0x110] sm:$0x3] %v1529
      %v1534 = vld [vmem:[%s138 + $0x2] sm:$0xff]
      %v1536 = vcombine.low %v1534, %v1534
      %v1538 = vunpack.c.l.s4 1983009808
      %v1539 = vunpack.c.0.s8 %v1538
      %v1540 = vlaneseq
      %v1541 = vshrl.u32 %v1540, 7
      %v1542 = vsub.s32 %v1539, %v1541
      %v1543 = vrot.slane %v1536, %v1542
      %v1545 = vunpack.c.l.s4 1983009808
      %v1546 = vunpack.c.0.s8 %v1545
      %v1547 = vlaneseq
      %v1548 = vshrl.u32 %v1547, 7
      %v1549 = vsub.s32 %v1546, %v1548
      %v1550 = vrot.slane %v1534, %v1549
      %1551 = vrot.lane.b32.xlu0 %v1543, 109
      %v1552 = vpop.permute.xlu0 %1551
      %1553 = vrot.lane.b32.xlu0 %v1550, 109
      %v1554 = vpop.permute.xlu0 %1553
      %v1555 = vrot.slane %v1552, 4
      %v1556 = vrot.slane %v1554, 4
      %v1557 = vsel %vm192, %v1555, %v1556
      %vm1558 = vcmask 891904
      %v1559 = vsel %vm1558, %v1552, %v1557
      %v1560 = vsel %vm1558, %v1554, %v1556
      %1563 = vst [vmem:[#allocation2 + $0x108] sm:$0xcc] %v1559
      %1564 = vst [vmem:[#allocation2 + $0x110] sm:$0xc] %v1560
      %v1565 = vld [vmem:[%s138 + $0x2] sm:$0xff]
      %v1567 = vcombine.high %v1565, %v1565
      %v1569 = vunpack.c.l.s4 1983009808
      %v1570 = vunpack.c.0.s8 %v1569
      %v1571 = vlaneseq
      %v1572 = vshrl.u32 %v1571, 7
      %v1573 = vsub.s32 %v1570, %v1572
      %v1574 = vrot.slane %v1565, %v1573
      %v1576 = vunpack.c.l.s4 1983009808
      %v1577 = vunpack.c.0.s8 %v1576
      %v1578 = vlaneseq
      %v1579 = vshrl.u32 %v1578, 7
      %v1580 = vsub.s32 %v1577, %v1579
      %v1581 = vrot.slane %v1567, %v1580
      %1582 = vrot.lane.b32.xlu0 %v1574, 108
      %v1583 = vpop.permute.xlu0 %1582
      %1584 = vrot.lane.b32.xlu0 %v1581, 108
      %v1585 = vpop.permute.xlu0 %1584
      %v1586 = vrot.slane %v1583, 4
      %v1587 = vrot.slane %v1585, 4
      %v1588 = vsel %vm192, %v1586, %v1587
      %vm1589 = vcmask 883712
      %v1590 = vsel %vm1589, %v1583, %v1588
      %v1591 = vsel %vm1589, %v1585, %v1587
      %1594 = vst [vmem:[#allocation2 + $0x114] sm:$0x33] %v1590
      %1595 = vst [vmem:[#allocation2 + $0x11c] sm:$0x3] %v1591
      %v1596 = vld [vmem:[%s138 + $0x2] sm:$0xff]
      %v1598 = vcombine.low %v1596, %v1596
      %v1600 = vunpack.c.l.s4 1983009808
      %v1601 = vunpack.c.0.s8 %v1600
      %v1602 = vlaneseq
      %v1603 = vshrl.u32 %v1602, 7
      %v1604 = vsub.s32 %v1601, %v1603
      %v1605 = vrot.slane %v1598, %v1604
      %v1607 = vunpack.c.l.s4 1983009808
      %v1608 = vunpack.c.0.s8 %v1607
      %v1609 = vlaneseq
      %v1610 = vshrl.u32 %v1609, 7
      %v1611 = vsub.s32 %v1608, %v1610
      %v1612 = vrot.slane %v1596, %v1611
      %1613 = vrot.lane.b32.xlu0 %v1605, 107
      %v1614 = vpop.permute.xlu0 %1613
      %1615 = vrot.lane.b32.xlu0 %v1612, 107
      %v1616 = vpop.permute.xlu0 %1615
      %v1617 = vrot.slane %v1614, 4
      %v1618 = vrot.slane %v1616, 4
      %v1619 = vsel %vm192, %v1617, %v1618
      %vm1620 = vcmask 875520
      %v1621 = vsel %vm1620, %v1614, %v1619
      %v1622 = vsel %vm1620, %v1616, %v1618
      %1625 = vst [vmem:[#allocation2 + $0x114] sm:$0xcc] %v1621
      %1626 = vst [vmem:[#allocation2 + $0x11c] sm:$0xc] %v1622
      %v1627 = vld [vmem:[%s138 + $0x2] sm:$0xff]
      %v1629 = vcombine.high %v1627, %v1627
      %v1631 = vunpack.c.l.s4 1983009808
      %v1632 = vunpack.c.0.s8 %v1631
      %v1633 = vlaneseq
      %v1634 = vshrl.u32 %v1633, 7
      %v1635 = vsub.s32 %v1632, %v1634
      %v1636 = vrot.slane %v1627, %v1635
      %v1638 = vunpack.c.l.s4 1983009808
      %v1639 = vunpack.c.0.s8 %v1638
      %v1640 = vlaneseq
      %v1641 = vshrl.u32 %v1640, 7
      %v1642 = vsub.s32 %v1639, %v1641
      %v1643 = vrot.slane %v1629, %v1642
      %1644 = vrot.lane.b32.xlu0 %v1636, 106
      %v1645 = vpop.permute.xlu0 %1644
      %1646 = vrot.lane.b32.xlu0 %v1643, 106
      %v1647 = vpop.permute.xlu0 %1646
      %v1648 = vrot.slane %v1645, 4
      %v1649 = vrot.slane %v1647, 4
      %v1650 = vsel %vm192, %v1648, %v1649
      %vm1651 = vcmask 867328
      %v1652 = vsel %vm1651, %v1645, %v1650
      %v1653 = vsel %vm1651, %v1647, %v1649
      %1656 = vst [vmem:[#allocation2 + $0x120] sm:$0x33] %v1652
      %1657 = vst [vmem:[#allocation2 + $0x128] sm:$0x3] %v1653
      %v1658 = vld [vmem:[#allocation2] sm:$0xff]
      %v1659 = vld [vmem:[#allocation2 + $0x8] sm:$0xf]
      %v1660 = vld [vmem:[#allocation2 + $0xc] sm:$0xff]
      %v1661 = vld [vmem:[#allocation2 + $0x14] sm:$0xf]
      %v1662 = vld [vmem:[#allocation2 + $0x18] sm:$0xff]
      %v1663 = vld [vmem:[#allocation2 + $0x20] sm:$0xf]
      %v1664 = vld [vmem:[#allocation2 + $0x24] sm:$0xff]
      %v1665 = vld [vmem:[#allocation2 + $0x2c] sm:$0xf]
      %v1666 = vld [vmem:[#allocation2 + $0x30] sm:$0xff]
      %v1667 = vld [vmem:[#allocation2 + $0x38] sm:$0xf]
      %v1668 = vld [vmem:[#allocation2 + $0x3c] sm:$0xff]
      %v1669 = vld [vmem:[#allocation2 + $0x44] sm:$0xf]
      %v1670 = vld [vmem:[#allocation2 + $0x48] sm:$0xff]
      %v1671 = vld [vmem:[#allocation2 + $0x50] sm:$0xf]
      %v1672 = vld [vmem:[#allocation2 + $0x54] sm:$0xff]
      %v1673 = vld [vmem:[#allocation2 + $0x5c] sm:$0xf]
      %v1674 = vld [vmem:[#allocation2 + $0x60] sm:$0xff]
      %v1675 = vld [vmem:[#allocation2 + $0x68] sm:$0xf]
      %v1676 = vld [vmem:[#allocation2 + $0x6c] sm:$0xff]
      %v1677 = vld [vmem:[#allocation2 + $0x74] sm:$0xf]
      %v1678 = vld [vmem:[#allocation2 + $0x78] sm:$0xff]
      %v1679 = vld [vmem:[#allocation2 + $0x80] sm:$0xf]
      %v1680 = vld [vmem:[#allocation2 + $0x84] sm:$0xff]
      %v1681 = vld [vmem:[#allocation2 + $0x8c] sm:$0xf]
      %v1682 = vld [vmem:[#allocation2 + $0x90] sm:$0xff]
      %v1683 = vld [vmem:[#allocation2 + $0x98] sm:$0xf]
      %v1684 = vld [vmem:[#allocation2 + $0x9c] sm:$0xff]
      %v1685 = vld [vmem:[#allocation2 + $0xa4] sm:$0xf]
      %v1686 = vld [vmem:[#allocation2 + $0xa8] sm:$0xff]
      %v1687 = vld [vmem:[#allocation2 + $0xb0] sm:$0xf]
      %v1688 = vld [vmem:[#allocation2 + $0xb4] sm:$0xff]
      %v1689 = vld [vmem:[#allocation2 + $0xbc] sm:$0xf]
      %v1690 = vld [vmem:[#allocation2 + $0xc0] sm:$0xff]
      %v1691 = vld [vmem:[#allocation2 + $0xc8] sm:$0xf]
      %v1692 = vld [vmem:[#allocation2 + $0xcc] sm:$0xff]
      %v1693 = vld [vmem:[#allocation2 + $0xd4] sm:$0xf]
      %v1694 = vld [vmem:[#allocation2 + $0xd8] sm:$0xff]
      %v1695 = vld [vmem:[#allocation2 + $0xe0] sm:$0xf]
      %v1696 = vld [vmem:[#allocation2 + $0xe4] sm:$0xff]
      %v1697 = vld [vmem:[#allocation2 + $0xec] sm:$0xf]
      %v1698 = vld [vmem:[#allocation2 + $0xf0] sm:$0xff]
      %v1699 = vld [vmem:[#allocation2 + $0xf8] sm:$0xf]
      %v1700 = vld [vmem:[#allocation2 + $0xfc] sm:$0xff]
      %v1701 = vld [vmem:[#allocation2 + $0x104] sm:$0xf]
      %v1702 = vld [vmem:[#allocation2 + $0x108] sm:$0xff]
      %v1703 = vld [vmem:[#allocation2 + $0x110] sm:$0xf]
      %v1704 = vld [vmem:[#allocation2 + $0x114] sm:$0xff]
      %v1705 = vld [vmem:[#allocation2 + $0x11c] sm:$0xf]
      %v1706 = vld [vmem:[#allocation2 + $0x120] sm:$0x33]
      %v1707 = vld [vmem:[#allocation2 + $0x128] sm:$0x3]
      %v1711 = vunpack.c.l.b16 %v145
      %v1712 = vunpack.c.h.b16 %v145
      %v1713 = vunpack.c.l.b16 %v146
      %v1714 = vunpack.c.h.b16 %v146
      %v1715 = vunpack.c.l.b16 %v147
      %v1716 = vunpack.c.h.b16 %v147
      %v1717 = vpack.c.b16 %v1713, %v1711
      %v1718 = vpack.c.b16 %v1714, %v1712
      %v1719 = vpack.c.b16 %v1715, %v1715
      %v1720 = vpack.c.b16 %v1716, %v1716
      %v1773 = vunpack.c.l.b16 %v1658
      %v1774 = vunpack.c.h.b16 %v1658
      %v1775 = vunpack.c.l.b16 %v1659
      %v1776 = vunpack.c.l.b16 %v1660
      %v1777 = vunpack.c.h.b16 %v1660
      %v1778 = vunpack.c.l.b16 %v1661
      %v1779 = vunpack.c.l.b16 %v1662
      %v1780 = vunpack.c.h.b16 %v1662
      %v1781 = vunpack.c.l.b16 %v1663
      %v1782 = vunpack.c.l.b16 %v1664
      %v1783 = vunpack.c.h.b16 %v1664
      %v1784 = vunpack.c.l.b16 %v1665
      %v1785 = vunpack.c.l.b16 %v1666
      %v1786 = vunpack.c.h.b16 %v1666
      %v1787 = vunpack.c.l.b16 %v1667
      %v1788 = vunpack.c.l.b16 %v1668
      %v1789 = vunpack.c.h.b16 %v1668
      %v1790 = vunpack.c.l.b16 %v1669
      %v1791 = vunpack.c.l.b16 %v1670
      %v1792 = vunpack.c.h.b16 %v1670
      %v1793 = vunpack.c.l.b16 %v1671
      %v1794 = vunpack.c.l.b16 %v1672
      %v1795 = vunpack.c.h.b16 %v1672
      %v1796 = vunpack.c.l.b16 %v1673
      %v1797 = vunpack.c.l.b16 %v1674
      %v1798 = vunpack.c.h.b16 %v1674
      %v1799 = vunpack.c.l.b16 %v1675
      %v1800 = vunpack.c.l.b16 %v1676
      %v1801 = vunpack.c.h.b16 %v1676
      %v1802 = vunpack.c.l.b16 %v1677
      %v1803 = vunpack.c.l.b16 %v1678
      %v1804 = vunpack.c.h.b16 %v1678
      %v1805 = vunpack.c.l.b16 %v1679
      %v1806 = vunpack.c.l.b16 %v1680
      %v1807 = vunpack.c.h.b16 %v1680
      %v1808 = vunpack.c.l.b16 %v1681
      %v1809 = vunpack.c.l.b16 %v1682
      %v1810 = vunpack.c.h.b16 %v1682
      %v1811 = vunpack.c.l.b16 %v1683
      %v1812 = vunpack.c.l.b16 %v1684
      %v1813 = vunpack.c.h.b16 %v1684
      %v1814 = vunpack.c.l.b16 %v1685
      %v1815 = vunpack.c.l.b16 %v1686
      %v1816 = vunpack.c.h.b16 %v1686
      %v1817 = vunpack.c.l.b16 %v1687
      %v1818 = vunpack.c.l.b16 %v1688
      %v1819 = vunpack.c.h.b16 %v1688
      %v1820 = vunpack.c.l.b16 %v1689
      %v1821 = vunpack.c.l.b16 %v1690
      %v1822 = vunpack.c.h.b16 %v1690
      %v1823 = vunpack.c.l.b16 %v1691
      %v1824 = vunpack.c.l.b16 %v1692
      %v1825 = vunpack.c.h.b16 %v1692
      %v1826 = vunpack.c.l.b16 %v1693
      %v1827 = vunpack.c.l.b16 %v1694
      %v1828 = vunpack.c.h.b16 %v1694
      %v1829 = vunpack.c.l.b16 %v1695
      %v1830 = vunpack.c.l.b16 %v1696
      %v1831 = vunpack.c.h.b16 %v1696
      %v1832 = vunpack.c.l.b16 %v1697
      %v1833 = vunpack.c.l.b16 %v1698
      %v1834 = vunpack.c.h.b16 %v1698
      %v1835 = vunpack.c.l.b16 %v1699
      %v1836 = vunpack.c.l.b16 %v1700
      %v1837 = vunpack.c.h.b16 %v1700
      %v1838 = vunpack.c.l.b16 %v1701
      %v1839 = vunpack.c.l.b16 %v1702
      %v1840 = vunpack.c.h.b16 %v1702
      %v1841 = vunpack.c.l.b16 %v1703
      %v1842 = vunpack.c.l.b16 %v1704
      %v1843 = vunpack.c.h.b16 %v1704
      %v1844 = vunpack.c.l.b16 %v1705
      %v1845 = vunpack.c.l.b16 %v1706
      %v1846 = vunpack.c.h.b16 %v1706
      %v1847 = vunpack.c.l.b16 %v1707
      %v1848 = vpack.c.b16 %v1776, %v1773
      %v1849 = vpack.c.b16 %v1777, %v1774
      %v1850 = vpack.c.b16 %v1778, %v1775
      %v1851 = vpack.c.b16 %v1782, %v1779
      %v1852 = vpack.c.b16 %v1783, %v1780
      %v1853 = vpack.c.b16 %v1784, %v1781
      %v1854 = vpack.c.b16 %v1788, %v1785
      %v1855 = vpack.c.b16 %v1789, %v1786
      %v1856 = vpack.c.b16 %v1790, %v1787
      %v1857 = vpack.c.b16 %v1794, %v1791
      %v1858 = vpack.c.b16 %v1795, %v1792
      %v1859 = vpack.c.b16 %v1796, %v1793
      %v1860 = vpack.c.b16 %v1800, %v1797
      %v1861 = vpack.c.b16 %v1801, %v1798
      %v1862 = vpack.c.b16 %v1802, %v1799
      %v1863 = vpack.c.b16 %v1806, %v1803
      %v1864 = vpack.c.b16 %v1807, %v1804
      %v1865 = vpack.c.b16 %v1808, %v1805
      %v1866 = vpack.c.b16 %v1812, %v1809
      %v1867 = vpack.c.b16 %v1813, %v1810
      %v1868 = vpack.c.b16 %v1814, %v1811
      %v1869 = vpack.c.b16 %v1818, %v1815
      %v1870 = vpack.c.b16 %v1819, %v1816
      %v1871 = vpack.c.b16 %v1820, %v1817
      %v1872 = vpack.c.b16 %v1824, %v1821
      %v1873 = vpack.c.b16 %v1825, %v1822
      %v1874 = vpack.c.b16 %v1826, %v1823
      %v1875 = vpack.c.b16 %v1830, %v1827
      %v1876 = vpack.c.b16 %v1831, %v1828
      %v1877 = vpack.c.b16 %v1832, %v1829
      %v1878 = vpack.c.b16 %v1836, %v1833
      %v1879 = vpack.c.b16 %v1837, %v1834
      %v1880 = vpack.c.b16 %v1838, %v1835
      %v1881 = vpack.c.b16 %v1842, %v1839
      %v1882 = vpack.c.b16 %v1843, %v1840
      %v1883 = vpack.c.b16 %v1844, %v1841
      %v1884 = vpack.c.b16 %v1845, %v1845
      %v1885 = vpack.c.b16 %v1846, %v1846
      %v1886 = vpack.c.b16 %v1847, %v1847
      %vm1923 = vcmask 556032
      %v1925 = vsel %vm1923, %v1718, 0
      %v1928 = vsel %vm1923, %v1720, 0
      %vm1930 = vcmask 1041408
      %v1932 = vsel %vm1930, %v1884, 0
      %v1935 = vsel %vm1930, %v1885, 0
      %v1938 = vsel %vm1930, %v1886, 0
      %1940 = vmatprep.subr.bf16.mxu0 %v1870
      %1941 = vmatpush1.bf16.msra.mxu0 %v1869
      %1942 = vmatprep.subr.bf16.mxu0 %v1867
      %1943 = vmatpush1.bf16.msra.mxu0 %v1866
      %1944 = vmatprep.subr.bf16.mxu0 %v1864
      %1945 = vmatpush1.bf16.msra.mxu0 %v1863
      %1946 = vmatprep.subr.bf16.mxu0 %v1861
      %1947 = vmatpush1.bf16.msra.mxu0 %v1860
      %1948 = vmatprep.subr.bf16.mxu0 %v1858
      %1949 = vmatpush1.bf16.msra.mxu0 %v1857
      %1950 = vmatprep.subr.bf16.mxu0 %v1855
      %1951 = vmatpush1.bf16.msra.mxu0 %v1854
      %1952 = vmatprep.subr.bf16.mxu0 %v1852
      %1953 = vmatpush1.bf16.msra.mxu0 %v1851
      %1954 = vmatprep.subr.bf16.mxu0 %v1849
      %1955 = vmatpush1.bf16.msra.mxu0 %v1848
      %1956 = vmatprep.subr.bf16.mxu0 0
      %1957 = vmatpush2.bf16.msra.mxu0 0
      %1958 = vmatprep.subr.bf16.mxu0 0
      %1959 = vmatpush2.bf16.msra.mxu0 0
      %1960 = vmatprep.subr.bf16.mxu0 0
      %1961 = vmatpush2.bf16.msra.mxu0 0
      %1962 = vmatprep.subr.bf16.mxu0 %v1935
      %1963 = vmatpush2.bf16.msra.mxu0 %v1932
      %1964 = vmatprep.subr.bf16.mxu0 %v1882
      %1965 = vmatpush2.bf16.msra.mxu0 %v1881
      %1966 = vmatprep.subr.bf16.mxu0 %v1879
      %1967 = vmatpush2.bf16.msra.mxu0 %v1878
      %1968 = vmatprep.subr.bf16.mxu0 %v1876
      %1969 = vmatpush2.bf16.msra.mxu0 %v1875
      %1970 = vmatprep.subr.bf16.mxu0 %v1873
      %1971 = vmatpush2.bf16.msra.mxu0 %v1872
      %1972 = vmatprep.mubr.bf16.mxu0 %v1925
      %1973 = vmatmul.mubr.bf16.gmra.mxu0 %v1717
      %v1974 = vpop.f32.mrf.mxu0
      %v1975 = vadd.f32 0.0, %v1974
      %v1976 = vpop.f32.mrf.mxu0
      %v1977 = vadd.f32 0.0, %v1976
      %v1978 = vpop.f32.mrf.mxu0
      %v1979 = vadd.f32 0.0, %v1978
      %v1980 = vpop.f32.mrf.mxu0
      %v1981 = vadd.f32 0.0, %v1980
      %1982 = vmatprep.mubr.bf16.mxu0 %v1928
      %1983 = vmatmul.mubr.bf16.gmra.mxu0 %v1719
      %v1984 = vpop.f32.mrf.mxu0
      %v1985 = vadd.f32 0.0, %v1984
      %v1986 = vpop.f32.mrf.mxu0
      %v1987 = vadd.f32 0.0, %v1986
      %v1988 = vpop.f32.mrf.mxu0
      %v1989 = vpop.f32.mrf.mxu0
      %1990 = vdwg.mxu0
      %1991 = vmatprep.subr.bf16.mxu0 0
      %1992 = vmatpush1.bf16.msra.mxu0 %v1871
      %1993 = vmatprep.subr.bf16.mxu0 0
      %1994 = vmatpush1.bf16.msra.mxu0 %v1868
      %1995 = vmatprep.subr.bf16.mxu0 0
      %1996 = vmatpush1.bf16.msra.mxu0 %v1865
      %1997 = vmatprep.subr.bf16.mxu0 0
      %1998 = vmatpush1.bf16.msra.mxu0 %v1862
      %1999 = vmatprep.subr.bf16.mxu0 0
      %2000 = vmatpush1.bf16.msra.mxu0 %v1859
      %2001 = vmatprep.subr.bf16.mxu0 0
      %2002 = vmatpush1.bf16.msra.mxu0 %v1856
      %2003 = vmatprep.subr.bf16.mxu0 0
      %2004 = vmatpush1.bf16.msra.mxu0 %v1853
      %2005 = vmatprep.subr.bf16.mxu0 0
      %2006 = vmatpush1.bf16.msra.mxu0 %v1850
      %2007 = vmatprep.subr.bf16.mxu0 0
      %2008 = vmatpush2.bf16.msra.mxu0 0
      %2009 = vmatprep.subr.bf16.mxu0 0
      %2010 = vmatpush2.bf16.msra.mxu0 0
      %2011 = vmatprep.subr.bf16.mxu0 0
      %2012 = vmatpush2.bf16.msra.mxu0 0
      %2013 = vmatprep.subr.bf16.mxu0 0
      %2014 = vmatpush2.bf16.msra.mxu0 %v1938
      %2015 = vmatprep.subr.bf16.mxu0 0
      %2016 = vmatpush2.bf16.msra.mxu0 %v1883
      %2017 = vmatprep.subr.bf16.mxu0 0
      %2018 = vmatpush2.bf16.msra.mxu0 %v1880
      %2019 = vmatprep.subr.bf16.mxu0 0
      %2020 = vmatpush2.bf16.msra.mxu0 %v1877
      %2021 = vmatprep.subr.bf16.mxu0 0
      %2022 = vmatpush2.bf16.msra.mxu0 %v1874
      %2023 = vmatprep.mubr.bf16.mxu0 %v1925
      %2024 = vmatmul.mubr.bf16.gmra.mxu0 %v1717
      %v2025 = vpop.f32.mrf.mxu0
      %v2026 = vadd.f32 0.0, %v2025
      %v2027 = vpop.f32.mrf.mxu0
      %v2028 = vpop.f32.mrf.mxu0
      %v2029 = vadd.f32 0.0, %v2028
      %v2030 = vpop.f32.mrf.mxu0
      %2031 = vmatprep.mubr.bf16.mxu0 %v1928
      %2032 = vmatmul.mubr.bf16.gmra.mxu0 %v1719
      %v2033 = vpop.f32.mrf.mxu0
      %v2034 = vadd.f32 0.0, %v2033
      %v2035 = vpop.f32.mrf.mxu0
      %v2036 = vpop.f32.mrf.mxu0
      %v2037 = vpop.f32.mrf.mxu0
      %2038 = vdwg.mxu0
      %v2039 = vmax.f32 %v1975, 0.0
      %v2040 = vmax.f32 %v1977, 0.0
      %v2041 = vmax.f32 %v2026, 0.0
      %v2042 = vmax.f32 %v1979, 0.0
      %v2043 = vmax.f32 %v1981, 0.0
      %v2044 = vmax.f32 %v2029, 0.0
      %v2045 = vmax.f32 %v1985, 0.0
      %v2046 = vmax.f32 %v1987, 0.0
      %v2047 = vmax.f32 %v2034, 0.0
      %2048 = vst [vmem:[%s143] sm:$0xff] %v2039
      %2049 = vst [vmem:[%s143 + $0x8] sm:$0xff] %v2040
      %2050 = vst [vmem:[%s143 + $0x10] sm:$0xff] %v2041
      %2051 = vst [vmem:[%s143 + $0x18] sm:$0xff] %v2042
      %2052 = vst [vmem:[%s143 + $0x20] sm:$0xff] %v2043
      %2053 = vst [vmem:[%s143 + $0x28] sm:$0xff] %v2044
      %2054 = vst [vmem:[%s143 + $0x30] sm:$0xff] %v2045
      %2055 = vst [vmem:[%s143 + $0x38] sm:$0xff] %v2046
      %2056 = vst [vmem:[%s143 + $0x40] sm:$0xff] %v2047
      %p2057 = scmp.lt.s32.totalorder %s13, 1
      %s2058 = scalar_select %p2057, %s13, 1
      %s2059 = smul.addr %s2058, 9
      %s2060 = smul.addr %s2059, 8
      %s2061 = scalar_lea.vmem %s2, %s2060
      // Predicated region
      $region29: #{multiscale_conv_block.1} parent=27 // pred_check
        %p2062 = pneg %p78
      $region30: #{multiscale_conv_block.1} parent=27 // pred_check_branch
        %2064 = sbr.rel (%p2062) target = $region32
      $region31: #{multiscale_conv_block.1} parent=27 // pred_region
        _
      $region32: #{multiscale_conv_block.1} parent=27 // pred_fallthru
        _
    $region28: #{multiscale_conv_block.1} parent=5 // pred_fallthru
      _
    %p2065 = scmp.le.s32.totalorder 2, %s8
    // Predicated region
    $region33: #{multiscale_conv_block.1} parent=5 // pred_check
      %p2066 = pneg %p2065
    $region34: #{multiscale_conv_block.1} parent=5 // pred_check_branch
      %2068 = sbr.rel (%p2066) target = $region36
    $region35: #{multiscale_conv_block.1} parent=5 // pred_region
      %s2069 = ssub.s32 %s8, 2
      // Predicated region
      $region37: #{multiscale_conv_block.1} parent=35 // pred_check
        %p2070 = pneg %p84
      $region38: #{multiscale_conv_block.1} parent=35 // pred_check_branch
        %2072 = sbr.rel (%p2070) target = $region40
      $region39: #{multiscale_conv_block.1} parent=35 // pred_region
        %p2073 = scmp.lt.s32.totalorder %s14, 1
        %s2074 = scalar_select %p2073, %s14, 1
        %s2075 = smul.addr %s2074, 9
        %s2076 = smul.addr %s2075, 8
        %s2077 = scalar_lea.vmem %s2, %s2076
      $region40: #{multiscale_conv_block.1} parent=35 // pred_fallthru
        _
    $region36: #{multiscale_conv_block.1} parent=5 // pred_fallthru
      _
  $region6: #{multiscale_conv_block.1} parent=0 // loop_footer
    %s12 = sadd.s32 1, %s8
  $region7: #{multiscale_conv_block.1} parent=0 // loop_footer_branch
    %7 = sbr.rel target = $region3
  $region8: #{multiscale_conv_block.1} parent=0 // loop_exit
    _

</llo_original>
